<compile_context>
chip_gen: v7x
topology: tpu7x:2x2x1
jax: 0.10.0
libtpu: 0.0.40
codegen_flags: <defaults>
</compile_context>

<pallas_src>
import functools

import jax
import jax.numpy as jnp
import numpy as np
from jax import lax
from jax.experimental import pallas as pl
from jax.experimental.pallas import tpu as pltpu

# Matmul operand dtype.  bf16 would halve VMEM/HBM traffic and double the MXU
# rate on v6e/v7x, but these matmuls are tiny and we keep f32 to stay
# bit-faithful to the f32 reference used in the correctness check.
_MATMUL_DTYPE = jnp.float32


# -----------------------------------------------------------------------------
# Pallas kernel: one ConvMGU layer, full time recurrence, one (b, t) per step.
# -----------------------------------------------------------------------------
def _mgu_layer_kernel(x_ref, w1_ref, wch_ref, bg_ref, bc_ref,
                      gnw_ref, gnb_ref, pool_ref, maskc_ref, maskh_ref,
                      h0_ref, out_ref, comb_ref,
                      *, kh, kw, H, W, cin_p, ch, n_groups, eps):
    HW = H * W
    ph, pw = kh // 2, kw // 2

    # Re-initialize the carried hidden state at the start of every sequence.
    @pl.when(pl.program_id(1) == 0)
    def _():
        comb_ref[cin_p:, :] = jnp.broadcast_to(h0_ref[...], (ch, HW))

    # Stage the current input next to the resident hidden state (no concat).
    comb_ref[:cin_p, :] = x_ref[0, 0]
    comb = comb_ref[...]                      # (cin_p + ch, HW)
    h = comb[cin_p:]                          # (ch, HW)

    def rolled(a):
        # a: (cp, HW) -> (kh*kw*cp, HW): each tap is a static lane roll
        # (row/col shift in flattened space); taps stacked along sublanes.
        slabs = []
        for ky in range(kh):
            for kx in range(kw):
                delta = (ky - ph) * W + (kx - pw)
                slabs.append(a if delta == 0 else jnp.roll(a, -delta, axis=1))
        return jnp.concatenate(slabs, axis=0)

    # Fused matmul: gate conv ([x; h]) + candidate conv's x-only part share
    # one im2col and one MXU contraction.  Border wrap is killed by a single
    # precomputed {0,1} mask multiply (aligned vreg mul, no iota/cmp chains).
    cols1 = (rolled(comb) * maskc_ref[...]).astype(_MATMUL_DTYPE)
    mm1 = jnp.dot(w1_ref[...].astype(_MATMUL_DTYPE), cols1,
                  preferred_element_type=jnp.float32)        # (2*ch, HW)
    f = jax.nn.sigmoid(mm1[:ch] + bg_ref[...])
    cand_x = mm1[ch:]

    # Candidate conv's h-part uses f*h (second im2col + matmul).
    cols2 = (rolled(f * h) * maskh_ref[...]).astype(_MATMUL_DTYPE)
    cand_h = jnp.dot(wch_ref[...].astype(_MATMUL_DTYPE), cols2,
                     preferred_element_type=jnp.float32)
    hc_pre = cand_x + cand_h + bc_ref[...]                   # (ch, HW)

    # GroupNorm over (channels-in-group, spatial) per sample, without any
    # lane slicing: a (ch, ch) group-pooling matmul (resident constant) sums
    # channels within each group, a lane reduce sums over space.
    cpg = ch // n_groups
    inv_n = 1.0 / (cpg * HW)
    gsum = jnp.dot(pool_ref[...], hc_pre, preferred_element_type=jnp.float32)
    gsq = jnp.dot(pool_ref[...], hc_pre * hc_pre,
                  preferred_element_type=jnp.float32)
    mu = jnp.sum(gsum, axis=1, keepdims=True) * inv_n        # (ch, 1)
    var = jnp.sum(gsq, axis=1, keepdims=True) * inv_n - mu * mu
    hc = jnp.tanh((hc_pre - mu) * lax.rsqrt(var + eps) * gnw_ref[...]
                  + gnb_ref[...])

    # Gated update; keep h resident in VMEM, emit a lane-dense output block.
    h_next = (1.0 - f) * h + f * hc
    comb_ref[cin_p:, :] = h_next
    out_ref[0, 0] = h_next.astype(out_ref.dtype)


# -----------------------------------------------------------------------------
# Host-side constants: border masks for the rolled im2col, group-pool matrix.
# -----------------------------------------------------------------------------
def _make_im2col_mask(kh, kw, H, W, rows_per_tap):
    ph, pw = kh // 2, kw // 2
    yy, xx = np.divmod(np.arange(H * W), W)
    taps = []
    for ky in range(kh):
        for kx in range(kw):
            dy, dx = ky - ph, kx - pw
            valid = ((yy + dy >= 0) & (yy + dy < H) &
                     (xx + dx >= 0) & (xx + dx < W)).astype(np.float32)
            taps.append(np.broadcast_to(valid, (rows_per_tap, H * W)))
    return jnp.asarray(np.concatenate(taps, axis=0))   # (kh*kw*rows, H*W)


def _make_group_pool(ch, n_groups):
    gi = np.arange(ch) // (ch // n_groups)
    return jnp.asarray((gi[:, None] == gi[None, :]).astype(np.float32))


# -----------------------------------------------------------------------------
# Wrapper: one layer over the full (B, T) sequence in a single pallas_call.
# -----------------------------------------------------------------------------
def conv_mgu_layer(x, params, *, n_groups=4, eps=1e-5):
    # x: (B, T, Cin, H, W) f32 (PyTorch channel layout) -> (B, T, Ch, H, W).
    B, T, Cin, H, W = x.shape
    ch = params["hidden_dim"]
    kh, kw = params["kh"], params["kw"]
    cin_p = params["cin_pad"]
    HW = H * W
    C1 = cin_p + ch
    assert ch % 8 == 0 and ch % n_groups == 0

    if cin_p > Cin:   # pad input channels to a sublane multiple (8) once
        x = jnp.pad(x, ((0, 0), (0, 0), (0, cin_p - Cin), (0, 0), (0, 0)))
    x_flat = x.reshape(B, T, cin_p, HW)          # lane-dense: last dim = H*W

    maskc = _make_im2col_mask(kh, kw, H, W, C1)  # (kh*kw*C1, HW)
    maskh = _make_im2col_mask(kh, kw, H, W, ch)  # (kh*kw*ch, HW)
    pool = _make_group_pool(ch, n_groups)        # (ch, ch)

    kernel = functools.partial(_mgu_layer_kernel, kh=kh, kw=kw, H=H, W=W,
                               cin_p=cin_p, ch=ch, n_groups=n_groups, eps=eps)
    const = lambda b, t: (0, 0)                  # constants: resident in VMEM

    out = pl.pallas_call(
        kernel,
        out_shape=jax.ShapeDtypeStruct((B, T, ch, HW), jnp.float32),
        grid_spec=pltpu.PrefetchScalarGridSpec(
            num_scalar_prefetch=0,
            grid=(B, T),                         # T = serial recurrent axis
            in_specs=[
                pl.BlockSpec((1, 1, cin_p, HW), lambda b, t: (b, t, 0, 0)),
                pl.BlockSpec((2 * ch, kh * kw * C1), const),   # fused W1
                pl.BlockSpec((ch, kh * kw * ch), const),       # cand h-part
                pl.BlockSpec((ch, 1), const),                  # bg
                pl.BlockSpec((ch, 1), const),                  # bc
                pl.BlockSpec((ch, 1), const),                  # gn weight
                pl.BlockSpec((ch, 1), const),                  # gn bias
                pl.BlockSpec((ch, ch), const),                 # group pool
                pl.BlockSpec((kh * kw * C1, HW), const),       # im2col mask
                pl.BlockSpec((kh * kw * ch, HW), const),       # im2col mask
                pl.BlockSpec((ch, 1), const),                  # h0
            ],
            out_specs=pl.BlockSpec((1, 1, ch, HW), lambda b, t: (b, t, 0, 0)),
            scratch_shapes=[pltpu.VMEM((C1, HW), jnp.float32)],  # [x; h]
        ),
        compiler_params=pltpu.CompilerParams(
            dimension_semantics=("parallel", "arbitrary")),
    )(x_flat, params["w1"], params["wch"], params["bg"], params["bc"],
      params["gnw"], params["gnb"], pool, maskc, maskh, params["h0"])

    return out.reshape(B, T, ch, H, W)


# -----------------------------------------------------------------------------
# Parameter init (PyTorch-shaped) and packing to the kernel layout.
# -----------------------------------------------------------------------------
def init_cell_params(key, input_dim, hidden_dim, kernel_size):
    kh, kw = kernel_size
    C = input_dim + hidden_dim
    k1, k2, k3, k4 = jax.random.split(key, 4)
    # TODO(synk): PyTorch uses nn.init.orthogonal_ (tanh gain); a deterministic
    # scaled-normal stand-in with identical tensor shapes is used instead.
    scale = (2.0 / (C * kh * kw)) ** 0.5
    wg = jax.random.normal(k1, (hidden_dim, C, kh, kw), jnp.float32) * scale
    wc = jax.random.normal(k2, (hidden_dim, C, kh, kw), jnp.float32) * scale
    bg = jnp.full((hidden_dim,), -2.0, jnp.float32)       # gate bias init -2.0
    bc = jax.random.uniform(k3, (hidden_dim,), jnp.float32, -0.1, 0.1)
    gnw = jnp.ones((hidden_dim,), jnp.float32)
    gnb = jnp.zeros((hidden_dim,), jnp.float32)
    h0 = jax.random.normal(k4, (hidden_dim,), jnp.float32)  # randn(1,Ch,1,1)
    return dict(wg=wg, wc=wc, bg=bg, bc=bc, gnw=gnw, gnb=gnb, h0=h0,
                kh=kh, kw=kw, input_dim=input_dim, hidden_dim=hidden_dim)


def pack_cell_params(p):
    """Repack PyTorch-layout conv weights into kernel (im2col) layout."""
    kh, kw = p["kh"], p["kw"]
    cin, ch = p["input_dim"], p["hidden_dim"]
    cin_p = max(8, -(-cin // 8) * 8)             # pad input channels to 8k
    C1 = cin_p + ch

    def pack_comb(w, zero_h):
        # (ch, Cin+Ch, kh, kw) -> (ch, kh*kw*C1) with per-tap channel order
        # [x_0..x_{cin_p-1} (zero-padded), h_0..h_{ch-1}].
        wx = jnp.transpose(w[:, :cin], (0, 2, 3, 1))        # (ch, kh, kw, cin)
        wx = jnp.pad(wx, ((0, 0), (0, 0), (0, 0), (0, cin_p - cin)))
        wh = jnp.transpose(w[:, cin:], (0, 2, 3, 1))        # (ch, kh, kw, ch)
        if zero_h:
            wh = jnp.zeros_like(wh)
        return jnp.concatenate([wx, wh], axis=-1).reshape(ch, kh * kw * C1)

    def pack_h(w):   # h-part only: (ch, kh*kw*ch)
        return jnp.transpose(w[:, cin:], (0, 2, 3, 1)).reshape(ch, kh * kw * ch)

    # Fused weight: rows [0:ch] = full gate conv on [x; h]; rows [ch:2ch] =
    # candidate conv's x-part (h columns zeroed, since cols1 carries h not f*h).
    w1 = jnp.concatenate(
        [pack_comb(p["wg"], zero_h=False), pack_comb(p["wc"], zero_h=True)],
        axis=0)
    return dict(
        w1=w1, wch=pack_h(p["wc"]),
        bg=p["bg"].reshape(ch, 1), bc=p["bc"].reshape(ch, 1),
        gnw=p["gnw"].reshape(ch, 1), gnb=p["gnb"].reshape(ch, 1),
        h0=p["h0"].reshape(ch, 1),
        kh=kh, kw=kw, hidden_dim=ch, input_dim=cin, cin_pad=cin_p)


# -----------------------------------------------------------------------------
# ConvMGU forward: layer stack (plain Python glue around per-layer kernels).
# -----------------------------------------------------------------------------
def conv_mgu_forward(x, layer_params, *, n_groups=4, return_all_layers=False):
    # x: (B, T, Cin, H, W)   (batch_first, PyTorch layout)
    layer_outputs, last_states = [], []
    cur = x
    for p in layer_params:
        out = conv_mgu_layer(cur, p["packed"], n_groups=n_groups)
        layer_outputs.append(out)                # (B, T, Ch, H, W)
        last_states.append(out[:, -1])           # (B, Ch, H, W)
        cur = out
    if not return_all_layers:
        layer_outputs, last_states = layer_outputs[-1:], last_states[-1:]
    return layer_outputs, last_states


# -----------------------------------------------------------------------------
# Pure-JAX reference (mirrors the PyTorch module) for correctness checking.
# -----------------------------------------------------------------------------
def _ref_cell_step(x, h, p, n_groups=4, eps=1e-5):
    def conv(inp, w, b):
        out = lax.conv_general_dilated(
            inp, w, (1, 1), "SAME",
            dimension_numbers=("NCHW", "OIHW", "NCHW"))
        return out + b.reshape(1, -1, 1, 1)

    comb = jnp.concatenate([x, h], axis=1)
    f = jax.nn.sigmoid(conv(comb, p["wg"], p["bg"]))
    comb2 = jnp.concatenate([x, f * h], axis=1)
    hc = conv(comb2, p["wc"], p["bc"])
    B, Ch, H, W = hc.shape
    g = hc.reshape(B, n_groups, Ch // n_groups, H, W)
    mu = jnp.mean(g, axis=(2, 3, 4), keepdims=True)
    var = jnp.mean((g - mu) ** 2, axis=(2, 3, 4), keepdims=True)
    g = (g - mu) * lax.rsqrt(var + eps)
    hc = g.reshape(B, Ch, H, W) * p["gnw"].reshape(1, Ch, 1, 1) \
        + p["gnb"].reshape(1, Ch, 1, 1)
    hc = jnp.tanh(hc)
    return (1.0 - f) * h + f * hc


def _ref_forward(x, layer_params, n_groups=4):
    B, T, _, H, W = x.shape
    cur = x
    for p in layer_params:
        ch = p["hidden_dim"]
        h = jnp.broadcast_to(p["h0"].reshape(1, ch, 1, 1), (B, ch, H, W))
        outs = []
        for t in range(T):
            h = _ref_cell_step(cur[:, t], h, p, n_groups=n_groups)
            outs.append(h)
        cur = jnp.stack(outs, axis=1)
    return cur, h


if __name__ == "__main__":
    # Small shapes consistent with the module: B=2, T=4, Cin=4, H=W=16,
    # hidden=8, kernel=(3,3), num_layers=2, n_groups=4.
    B, T, Cin, H, W = 2, 4, 4, 16, 16
    hidden, n_layers, n_groups = 8, 2, 4
    ksize = (3, 3)

    key = jax.random.PRNGKey(0)
    kx, kp = jax.random.split(key)
    x = jax.random.normal(kx, (B, T, Cin, H, W), jnp.float32)  # (B,T,C,H,W)

    layer_params = []
    for i, k in enumerate(jax.random.split(kp, n_layers)):
        cur_in = Cin if i == 0 else hidden
        p = init_cell_params(k, cur_in, hidden, ksize)
        p["packed"] = pack_cell_params(p)
        layer_params.append(p)

    outs, lasts = conv_mgu_forward(x, layer_params, n_groups=n_groups,
                                   return_all_layers=False)
    out = jax.block_until_ready(outs[0])         # (B, T, Ch, H, W)
    last_h = jax.block_until_ready(lasts[0])     # (B, Ch, H, W)

    ref_out, ref_h = _ref_forward(x, layer_params, n_groups=n_groups)
    ref_out = jax.block_until_ready(ref_out)
    ref_h = jax.block_until_ready(ref_h)

    np.testing.assert_allclose(np.asarray(out), np.asarray(ref_out),
                               rtol=1e-2, atol=1e-2)
    np.testing.assert_allclose(np.asarray(last_h), np.asarray(ref_h),
                               rtol=1e-2, atol=1e-2)

    print("KERNEL_OK")
</pallas_src>

<mosaic_0001>
module attributes {stable_mosaic.version = 11 : i64} {
  func.func @_mgu_layer_kernel(%arg0: i32, %arg1: i32, %arg2: memref<1x1x8x256xf32, #tpu.memory_space<vmem>>, %arg3: memref<16x144xf32, #tpu.memory_space<vmem>>, %arg4: memref<8x72xf32, #tpu.memory_space<vmem>>, %arg5: memref<8x1xf32, #tpu.memory_space<vmem>>, %arg6: memref<8x1xf32, #tpu.memory_space<vmem>>, %arg7: memref<8x1xf32, #tpu.memory_space<vmem>>, %arg8: memref<8x1xf32, #tpu.memory_space<vmem>>, %arg9: memref<8x8xf32, #tpu.memory_space<vmem>>, %arg10: memref<144x256xf32, #tpu.memory_space<vmem>>, %arg11: memref<72x256xf32, #tpu.memory_space<vmem>>, %arg12: memref<8x1xf32, #tpu.memory_space<vmem>>, %arg13: memref<1x1x8x256xf32, #tpu.memory_space<vmem>>, %arg14: memref<16x256xf32, #tpu.memory_space<vmem>>) attributes {dimension_semantics = [#tpu.dimension_semantics<parallel>, #tpu.dimension_semantics<arbitrary>], iteration_bounds = array<i64: 2, 4>, scalar_prefetch = 0 : i64, scratch_operands = 1 : i64, tpu.core_type = #tpu.core_type<tc>, window_params = [{transform_indices = @transform_0, window_bounds = array<i64: 1, 1, 8, 256>}, {pipeline_mode = #tpu.pipeline_mode<synchronous>, transform_indices = @transform_1, window_bounds = array<i64: 16, 144>}, {pipeline_mode = #tpu.pipeline_mode<synchronous>, transform_indices = @transform_2, window_bounds = array<i64: 8, 72>}, {pipeline_mode = #tpu.pipeline_mode<synchronous>, transform_indices = @transform_3, window_bounds = array<i64: 8, 1>}, {pipeline_mode = #tpu.pipeline_mode<synchronous>, transform_indices = @transform_4, window_bounds = array<i64: 8, 1>}, {pipeline_mode = #tpu.pipeline_mode<synchronous>, transform_indices = @transform_5, window_bounds = array<i64: 8, 1>}, {pipeline_mode = #tpu.pipeline_mode<synchronous>, transform_indices = @transform_6, window_bounds = array<i64: 8, 1>}, {pipeline_mode = #tpu.pipeline_mode<synchronous>, transform_indices = @transform_7, window_bounds = array<i64: 8, 8>}, {pipeline_mode = #tpu.pipeline_mode<synchronous>, transform_indices = @transform_8, window_bounds = array<i64: 144, 256>}, {pipeline_mode = #tpu.pipeline_mode<synchronous>, transform_indices = @transform_9, window_bounds = array<i64: 72, 256>}, {pipeline_mode = #tpu.pipeline_mode<synchronous>, transform_indices = @transform_10, window_bounds = array<i64: 8, 1>}, {transform_indices = @transform_11, window_bounds = array<i64: 1, 1, 8, 256>}]} {
    %c0_i32 = arith.constant 0 : i32
    %0 = arith.cmpi eq, %arg1, %c0_i32 : i32
    %1 = arith.extui %0 : i1 to i32
    %c0_i32_0 = arith.constant 0 : i32
    %2 = arith.cmpi ne, %1, %c0_i32_0 : i32
    scf.if %2 {
      %c0_43 = arith.constant 0 : index
      %c0_44 = arith.constant 0 : index
      %119 = vector.load %arg12[%c0_43, %c0_44] : memref<8x1xf32, #tpu.memory_space<vmem>>, vector<8x1xf32>
      %120 = vector.shape_cast %119 : vector<8x1xf32> to vector<8x1xf32>
      %121 = vector.broadcast %120 : vector<8x1xf32> to vector<8x256xf32>
      %c8_45 = arith.constant 8 : index
      %c0_46 = arith.constant 0 : index
      %122 = vector.load %arg14[%c8_45, %c0_46] : memref<16x256xf32, #tpu.memory_space<vmem>>, vector<8x256xf32>
      tpu.vector_store %arg14[%c8_45, %c0_46], %121 {strides = array<i32>} : memref<16x256xf32, #tpu.memory_space<vmem>>, vector<8x256xf32>,
    } else {
    }
    %c0 = arith.constant 0 : index
    %c0_1 = arith.constant 0 : index
    %c0_2 = arith.constant 0 : index
    %c0_3 = arith.constant 0 : index
    %3 = vector.load %arg2[%c0, %c0_1, %c0_2, %c0_3] : memref<1x1x8x256xf32, #tpu.memory_space<vmem>>, vector<1x1x8x256xf32>
    %4 = vector.shape_cast %3 : vector<1x1x8x256xf32> to vector<8x256xf32>
    %c0_4 = arith.constant 0 : index
    %c0_5 = arith.constant 0 : index
    %5 = vector.load %arg14[%c0_4, %c0_5] : memref<16x256xf32, #tpu.memory_space<vmem>>, vector<8x256xf32>
    tpu.vector_store %arg14[%c0_4, %c0_5], %4 {strides = array<i32>} : memref<16x256xf32, #tpu.memory_space<vmem>>, vector<8x256xf32>,
    %c0_6 = arith.constant 0 : index
    %c0_7 = arith.constant 0 : index
    %6 = vector.load %arg14[%c0_6, %c0_7] : memref<16x256xf32, #tpu.memory_space<vmem>>, vector<16x256xf32>
    %7 = vector.extract_strided_slice %6 {offsets = [8, 0], sizes = [8, 256], strides = [1, 1]} : vector<16x256xf32> to vector<8x256xf32>
    %8 = vector.extract_strided_slice %6 {offsets = [0, 239], sizes = [16, 17], strides = [1, 1]} : vector<16x256xf32> to vector<16x17xf32>
    %9 = vector.extract_strided_slice %6 {offsets = [0, 0], sizes = [16, 239], strides = [1, 1]} : vector<16x256xf32> to vector<16x239xf32>
    %10 = tpu.concatenate %8, %9 in 1 : vector<16x17xf32>, vector<16x239xf32> -> vector<16x256xf32>
    %11 = vector.extract_strided_slice %6 {offsets = [0, 240], sizes = [16, 16], strides = [1, 1]} : vector<16x256xf32> to vector<16x16xf32>
    %12 = vector.extract_strided_slice %6 {offsets = [0, 0], sizes = [16, 240], strides = [1, 1]} : vector<16x256xf32> to vector<16x240xf32>
    %13 = tpu.concatenate %11, %12 in 1 : vector<16x16xf32>, vector<16x240xf32> -> vector<16x256xf32>
    %14 = vector.extract_strided_slice %6 {offsets = [0, 241], sizes = [16, 15], strides = [1, 1]} : vector<16x256xf32> to vector<16x15xf32>
    %15 = vector.extract_strided_slice %6 {offsets = [0, 0], sizes = [16, 241], strides = [1, 1]} : vector<16x256xf32> to vector<16x241xf32>
    %16 = tpu.concatenate %14, %15 in 1 : vector<16x15xf32>, vector<16x241xf32> -> vector<16x256xf32>
    %17 = vector.extract_strided_slice %6 {offsets = [0, 255], sizes = [16, 1], strides = [1, 1]} : vector<16x256xf32> to vector<16x1xf32>
    %18 = vector.extract_strided_slice %6 {offsets = [0, 0], sizes = [16, 255], strides = [1, 1]} : vector<16x256xf32> to vector<16x255xf32>
    %19 = tpu.concatenate %17, %18 in 1 : vector<16x1xf32>, vector<16x255xf32> -> vector<16x256xf32>
    %20 = vector.extract_strided_slice %6 {offsets = [0, 1], sizes = [16, 255], strides = [1, 1]} : vector<16x256xf32> to vector<16x255xf32>
    %21 = vector.extract_strided_slice %6 {offsets = [0, 0], sizes = [16, 1], strides = [1, 1]} : vector<16x256xf32> to vector<16x1xf32>
    %22 = tpu.concatenate %20, %21 in 1 : vector<16x255xf32>, vector<16x1xf32> -> vector<16x256xf32>
    %23 = vector.extract_strided_slice %6 {offsets = [0, 15], sizes = [16, 241], strides = [1, 1]} : vector<16x256xf32> to vector<16x241xf32>
    %24 = vector.extract_strided_slice %6 {offsets = [0, 0], sizes = [16, 15], strides = [1, 1]} : vector<16x256xf32> to vector<16x15xf32>
    %25 = tpu.concatenate %23, %24 in 1 : vector<16x241xf32>, vector<16x15xf32> -> vector<16x256xf32>
    %26 = vector.extract_strided_slice %6 {offsets = [0, 16], sizes = [16, 240], strides = [1, 1]} : vector<16x256xf32> to vector<16x240xf32>
    %27 = vector.extract_strided_slice %6 {offsets = [0, 0], sizes = [16, 16], strides = [1, 1]} : vector<16x256xf32> to vector<16x16xf32>
    %28 = tpu.concatenate %26, %27 in 1 : vector<16x240xf32>, vector<16x16xf32> -> vector<16x256xf32>
    %29 = vector.extract_strided_slice %6 {offsets = [0, 17], sizes = [16, 239], strides = [1, 1]} : vector<16x256xf32> to vector<16x239xf32>
    %30 = vector.extract_strided_slice %6 {offsets = [0, 0], sizes = [16, 17], strides = [1, 1]} : vector<16x256xf32> to vector<16x17xf32>
    %31 = tpu.concatenate %29, %30 in 1 : vector<16x239xf32>, vector<16x17xf32> -> vector<16x256xf32>
    %32 = tpu.concatenate %10, %13, %16, %19, %6, %22, %25, %28, %31 in 0 : vector<16x256xf32>, vector<16x256xf32>, vector<16x256xf32>, vector<16x256xf32>, vector<16x256xf32>, vector<16x256xf32>, vector<16x256xf32>, vector<16x256xf32>, vector<16x256xf32> -> vector<144x256xf32>
    %c0_8 = arith.constant 0 : index
    %c0_9 = arith.constant 0 : index
    %33 = vector.load %arg10[%c0_8, %c0_9] : memref<144x256xf32, #tpu.memory_space<vmem>>, vector<144x256xf32>
    %34 = arith.mulf %32, %33 : vector<144x256xf32>
    %c0_10 = arith.constant 0 : index
    %c0_11 = arith.constant 0 : index
    %35 = vector.load %arg3[%c0_10, %c0_11] : memref<16x144xf32, #tpu.memory_space<vmem>>, vector<16x144xf32>
    %cst = arith.constant dense<0.000000e+00> : vector<16x256xf32>
    %36 = tpu.matmul %35, %34, %cst {dimension_numbers = #tpu.dot_dimension_numbers<[1], [0], [0], [1], [0, 0, 1, 1], [], []>} : vector<16x144xf32>, vector<144x256xf32>, vector<16x256xf32> -> vector<16x256xf32>
    %37 = vector.extract_strided_slice %36 {offsets = [0, 0], sizes = [8, 256], strides = [1, 1]} : vector<16x256xf32> to vector<8x256xf32>
    %c0_12 = arith.constant 0 : index
    %c0_13 = arith.constant 0 : index
    %38 = vector.load %arg5[%c0_12, %c0_13] : memref<8x1xf32, #tpu.memory_space<vmem>>, vector<8x1xf32>
    %39 = vector.broadcast %38 : vector<8x1xf32> to vector<8x256xf32>
    %40 = arith.addf %37, %39 : vector<8x256xf32>
    %41 = arith.negf %40 : vector<8x256xf32>
    %42 = math.exp %41 : vector<8x256xf32>
    %cst_14 = arith.constant 1.000000e+00 : f32
    %43 = vector.broadcast %cst_14 : f32 to vector<8x256xf32>
    %44 = arith.addf %43, %42 : vector<8x256xf32>
    %45 = arith.divf %43, %44 : vector<8x256xf32>
    %46 = vector.extract_strided_slice %36 {offsets = [8, 0], sizes = [8, 256], strides = [1, 1]} : vector<16x256xf32> to vector<8x256xf32>
    %47 = arith.mulf %45, %7 : vector<8x256xf32>
    %48 = vector.extract_strided_slice %47 {offsets = [0, 239], sizes = [8, 17], strides = [1, 1]} : vector<8x256xf32> to vector<8x17xf32>
    %49 = vector.extract_strided_slice %47 {offsets = [0, 0], sizes = [8, 239], strides = [1, 1]} : vector<8x256xf32> to vector<8x239xf32>
    %50 = tpu.concatenate %48, %49 in 1 : vector<8x17xf32>, vector<8x239xf32> -> vector<8x256xf32>
    %51 = vector.extract_strided_slice %47 {offsets = [0, 240], sizes = [8, 16], strides = [1, 1]} : vector<8x256xf32> to vector<8x16xf32>
    %52 = vector.extract_strided_slice %47 {offsets = [0, 0], sizes = [8, 240], strides = [1, 1]} : vector<8x256xf32> to vector<8x240xf32>
    %53 = tpu.concatenate %51, %52 in 1 : vector<8x16xf32>, vector<8x240xf32> -> vector<8x256xf32>
    %54 = vector.extract_strided_slice %47 {offsets = [0, 241], sizes = [8, 15], strides = [1, 1]} : vector<8x256xf32> to vector<8x15xf32>
    %55 = vector.extract_strided_slice %47 {offsets = [0, 0], sizes = [8, 241], strides = [1, 1]} : vector<8x256xf32> to vector<8x241xf32>
    %56 = tpu.concatenate %54, %55 in 1 : vector<8x15xf32>, vector<8x241xf32> -> vector<8x256xf32>
    %57 = vector.extract_strided_slice %47 {offsets = [0, 255], sizes = [8, 1], strides = [1, 1]} : vector<8x256xf32> to vector<8x1xf32>
    %58 = vector.extract_strided_slice %47 {offsets = [0, 0], sizes = [8, 255], strides = [1, 1]} : vector<8x256xf32> to vector<8x255xf32>
    %59 = tpu.concatenate %57, %58 in 1 : vector<8x1xf32>, vector<8x255xf32> -> vector<8x256xf32>
    %60 = vector.extract_strided_slice %47 {offsets = [0, 1], sizes = [8, 255], strides = [1, 1]} : vector<8x256xf32> to vector<8x255xf32>
    %61 = vector.extract_strided_slice %47 {offsets = [0, 0], sizes = [8, 1], strides = [1, 1]} : vector<8x256xf32> to vector<8x1xf32>
    %62 = tpu.concatenate %60, %61 in 1 : vector<8x255xf32>, vector<8x1xf32> -> vector<8x256xf32>
    %63 = vector.extract_strided_slice %47 {offsets = [0, 15], sizes = [8, 241], strides = [1, 1]} : vector<8x256xf32> to vector<8x241xf32>
    %64 = vector.extract_strided_slice %47 {offsets = [0, 0], sizes = [8, 15], strides = [1, 1]} : vector<8x256xf32> to vector<8x15xf32>
    %65 = tpu.concatenate %63, %64 in 1 : vector<8x241xf32>, vector<8x15xf32> -> vector<8x256xf32>
    %66 = vector.extract_strided_slice %47 {offsets = [0, 16], sizes = [8, 240], strides = [1, 1]} : vector<8x256xf32> to vector<8x240xf32>
    %67 = vector.extract_strided_slice %47 {offsets = [0, 0], sizes = [8, 16], strides = [1, 1]} : vector<8x256xf32> to vector<8x16xf32>
    %68 = tpu.concatenate %66, %67 in 1 : vector<8x240xf32>, vector<8x16xf32> -> vector<8x256xf32>
    %69 = vector.extract_strided_slice %47 {offsets = [0, 17], sizes = [8, 239], strides = [1, 1]} : vector<8x256xf32> to vector<8x239xf32>
    %70 = vector.extract_strided_slice %47 {offsets = [0, 0], sizes = [8, 17], strides = [1, 1]} : vector<8x256xf32> to vector<8x17xf32>
    %71 = tpu.concatenate %69, %70 in 1 : vector<8x239xf32>, vector<8x17xf32> -> vector<8x256xf32>
    %72 = tpu.concatenate %50, %53, %56, %59, %47, %62, %65, %68, %71 in 0 : vector<8x256xf32>, vector<8x256xf32>, vector<8x256xf32>, vector<8x256xf32>, vector<8x256xf32>, vector<8x256xf32>, vector<8x256xf32>, vector<8x256xf32>, vector<8x256xf32> -> vector<72x256xf32>
    %c0_15 = arith.constant 0 : index
    %c0_16 = arith.constant 0 : index
    %73 = vector.load %arg11[%c0_15, %c0_16] : memref<72x256xf32, #tpu.memory_space<vmem>>, vector<72x256xf32>
    %74 = arith.mulf %72, %73 : vector<72x256xf32>
    %c0_17 = arith.constant 0 : index
    %c0_18 = arith.constant 0 : index
    %75 = vector.load %arg4[%c0_17, %c0_18] : memref<8x72xf32, #tpu.memory_space<vmem>>, vector<8x72xf32>
    %cst_19 = arith.constant dense<0.000000e+00> : vector<8x256xf32>
    %76 = tpu.matmul %75, %74, %cst_19 {dimension_numbers = #tpu.dot_dimension_numbers<[1], [0], [0], [1], [0, 0, 1, 1], [], []>} : vector<8x72xf32>, vector<72x256xf32>, vector<8x256xf32> -> vector<8x256xf32>
    %77 = arith.addf %46, %76 : vector<8x256xf32>
    %c0_20 = arith.constant 0 : index
    %c0_21 = arith.constant 0 : index
    %78 = vector.load %arg6[%c0_20, %c0_21] : memref<8x1xf32, #tpu.memory_space<vmem>>, vector<8x1xf32>
    %79 = vector.broadcast %78 : vector<8x1xf32> to vector<8x256xf32>
    %80 = arith.addf %77, %79 : vector<8x256xf32>
    %c0_22 = arith.constant 0 : index
    %c0_23 = arith.constant 0 : index
    %81 = vector.load %arg9[%c0_22, %c0_23] : memref<8x8xf32, #tpu.memory_space<vmem>>, vector<8x8xf32>
    %cst_24 = arith.constant dense<0.000000e+00> : vector<8x256xf32>
    %82 = tpu.matmul %81, %80, %cst_24 {dimension_numbers = #tpu.dot_dimension_numbers<[1], [0], [0], [1], [0, 0, 1, 1], [], []>} : vector<8x8xf32>, vector<8x256xf32>, vector<8x256xf32> -> vector<8x256xf32>
    %c0_25 = arith.constant 0 : index
    %c0_26 = arith.constant 0 : index
    %83 = vector.load %arg9[%c0_25, %c0_26] : memref<8x8xf32, #tpu.memory_space<vmem>>, vector<8x8xf32>
    %84 = arith.mulf %80, %80 : vector<8x256xf32>
    %cst_27 = arith.constant dense<0.000000e+00> : vector<8x256xf32>
    %85 = tpu.matmul %83, %84, %cst_27 {dimension_numbers = #tpu.dot_dimension_numbers<[1], [0], [0], [1], [0, 0, 1, 1], [], []>} : vector<8x8xf32>, vector<8x256xf32>, vector<8x256xf32> -> vector<8x256xf32>
    %cst_28 = arith.constant dense<0.000000e+00> : vector<8xf32>
    %86 = vector.multi_reduction <add>, %82, %cst_28 [1] : vector<8x256xf32> to vector<8xf32>
    %87 = vector.shape_cast %86 : vector<8xf32> to vector<8x1xf32>
    %cst_29 = arith.constant 0.001953125 : f32
    %88 = vector.broadcast %cst_29 : f32 to vector<8x1xf32>
    %89 = arith.mulf %87, %88 : vector<8x1xf32>
    %cst_30 = arith.constant dense<0.000000e+00> : vector<8xf32>
    %90 = vector.multi_reduction <add>, %85, %cst_30 [1] : vector<8x256xf32> to vector<8xf32>
    %91 = vector.shape_cast %90 : vector<8xf32> to vector<8x1xf32>
    %cst_31 = arith.constant 0.001953125 : f32
    %92 = vector.broadcast %cst_31 : f32 to vector<8x1xf32>
    %93 = arith.mulf %91, %92 : vector<8x1xf32>
    %94 = arith.mulf %89, %89 : vector<8x1xf32>
    %95 = arith.subf %93, %94 : vector<8x1xf32>
    %96 = vector.broadcast %89 : vector<8x1xf32> to vector<8x256xf32>
    %97 = arith.subf %80, %96 : vector<8x256xf32>
    %cst_32 = arith.constant 9.99999974E-6 : f32
    %98 = vector.broadcast %cst_32 : f32 to vector<8x1xf32>
    %99 = arith.addf %95, %98 : vector<8x1xf32>
    %100 = math.rsqrt %99 : vector<8x1xf32>
    %101 = vector.broadcast %100 : vector<8x1xf32> to vector<8x256xf32>
    %102 = arith.mulf %97, %101 : vector<8x256xf32>
    %c0_33 = arith.constant 0 : index
    %c0_34 = arith.constant 0 : index
    %103 = vector.load %arg7[%c0_33, %c0_34] : memref<8x1xf32, #tpu.memory_space<vmem>>, vector<8x1xf32>
    %104 = vector.broadcast %103 : vector<8x1xf32> to vector<8x256xf32>
    %105 = arith.mulf %102, %104 : vector<8x256xf32>
    %c0_35 = arith.constant 0 : index
    %c0_36 = arith.constant 0 : index
    %106 = vector.load %arg8[%c0_35, %c0_36] : memref<8x1xf32, #tpu.memory_space<vmem>>, vector<8x1xf32>
    %107 = vector.broadcast %106 : vector<8x1xf32> to vector<8x256xf32>
    %108 = arith.addf %105, %107 : vector<8x256xf32>
    %109 = math.tanh %108 : vector<8x256xf32>
    %cst_37 = arith.constant 1.000000e+00 : f32
    %110 = vector.broadcast %cst_37 : f32 to vector<8x256xf32>
    %111 = arith.subf %110, %45 : vector<8x256xf32>
    %112 = arith.mulf %111, %7 : vector<8x256xf32>
    %113 = arith.mulf %45, %109 : vector<8x256xf32>
    %114 = arith.addf %112, %113 : vector<8x256xf32>
    %c8 = arith.constant 8 : index
    %c0_38 = arith.constant 0 : index
    %115 = vector.load %arg14[%c8, %c0_38] : memref<16x256xf32, #tpu.memory_space<vmem>>, vector<8x256xf32>
    tpu.vector_store %arg14[%c8, %c0_38], %114 {strides = array<i32>} : memref<16x256xf32, #tpu.memory_space<vmem>>, vector<8x256xf32>,
    %c0_39 = arith.constant 0 : index
    %c0_40 = arith.constant 0 : index
    %c0_41 = arith.constant 0 : index
    %c0_42 = arith.constant 0 : index
    %116 = vector.load %arg13[%c0_39, %c0_40, %c0_41, %c0_42] : memref<1x1x8x256xf32, #tpu.memory_space<vmem>>, vector<1x1x8x256xf32>
    %117 = vector.shape_cast %116 : vector<1x1x8x256xf32> to vector<8x256xf32>
    %118 = vector.shape_cast %114 : vector<8x256xf32> to vector<1x1x8x256xf32>
    tpu.vector_store %arg13[%c0_39, %c0_40, %c0_41, %c0_42], %118 {strides = array<i32>} : memref<1x1x8x256xf32, #tpu.memory_space<vmem>>, vector<1x1x8x256xf32>,
    return
  }
  func.func @transform_0(%arg0: i32, %arg1: i32) -> (i32, i32, i32, i32) {
    %c0_i32 = arith.constant 0 : i32
    %c0_i32_0 = arith.constant 0 : i32
    %c0_i32_1 = arith.constant 0 : i32
    return %arg0, %arg1, %c0_i32, %c0_i32_0 : i32, i32, i32, i32
  }
  func.func @transform_1(%arg0: i32, %arg1: i32) -> (i32, i32) {
    %c0_i32 = arith.constant 0 : i32
    %c0_i32_0 = arith.constant 0 : i32
    %c0_i32_1 = arith.constant 0 : i32
    return %c0_i32, %c0_i32_0 : i32, i32
  }
  func.func @transform_2(%arg0: i32, %arg1: i32) -> (i32, i32) {
    %c0_i32 = arith.constant 0 : i32
    %c0_i32_0 = arith.constant 0 : i32
    %c0_i32_1 = arith.constant 0 : i32
    return %c0_i32, %c0_i32_0 : i32, i32
  }
  func.func @transform_3(%arg0: i32, %arg1: i32) -> (i32, i32) {
    %c0_i32 = arith.constant 0 : i32
    %c0_i32_0 = arith.constant 0 : i32
    %c0_i32_1 = arith.constant 0 : i32
    return %c0_i32, %c0_i32_0 : i32, i32
  }
  func.func @transform_4(%arg0: i32, %arg1: i32) -> (i32, i32) {
    %c0_i32 = arith.constant 0 : i32
    %c0_i32_0 = arith.constant 0 : i32
    %c0_i32_1 = arith.constant 0 : i32
    return %c0_i32, %c0_i32_0 : i32, i32
  }
  func.func @transform_5(%arg0: i32, %arg1: i32) -> (i32, i32) {
    %c0_i32 = arith.constant 0 : i32
    %c0_i32_0 = arith.constant 0 : i32
    %c0_i32_1 = arith.constant 0 : i32
    return %c0_i32, %c0_i32_0 : i32, i32
  }
  func.func @transform_6(%arg0: i32, %arg1: i32) -> (i32, i32) {
    %c0_i32 = arith.constant 0 : i32
    %c0_i32_0 = arith.constant 0 : i32
    %c0_i32_1 = arith.constant 0 : i32
    return %c0_i32, %c0_i32_0 : i32, i32
  }
  func.func @transform_7(%arg0: i32, %arg1: i32) -> (i32, i32) {
    %c0_i32 = arith.constant 0 : i32
    %c0_i32_0 = arith.constant 0 : i32
    %c0_i32_1 = arith.constant 0 : i32
    return %c0_i32, %c0_i32_0 : i32, i32
  }
  func.func @transform_8(%arg0: i32, %arg1: i32) -> (i32, i32) {
    %c0_i32 = arith.constant 0 : i32
    %c0_i32_0 = arith.constant 0 : i32
    %c0_i32_1 = arith.constant 0 : i32
    return %c0_i32, %c0_i32_0 : i32, i32
  }
  func.func @transform_9(%arg0: i32, %arg1: i32) -> (i32, i32) {
    %c0_i32 = arith.constant 0 : i32
    %c0_i32_0 = arith.constant 0 : i32
    %c0_i32_1 = arith.constant 0 : i32
    return %c0_i32, %c0_i32_0 : i32, i32
  }
  func.func @transform_10(%arg0: i32, %arg1: i32) -> (i32, i32) {
    %c0_i32 = arith.constant 0 : i32
    %c0_i32_0 = arith.constant 0 : i32
    %c0_i32_1 = arith.constant 0 : i32
    return %c0_i32, %c0_i32_0 : i32, i32
  }
  func.func @transform_11(%arg0: i32, %arg1: i32) -> (i32, i32, i32, i32) {
    %c0_i32 = arith.constant 0 : i32
    %c0_i32_0 = arith.constant 0 : i32
    %c0_i32_1 = arith.constant 0 : i32
    return %arg0, %arg1, %c0_i32, %c0_i32_0 : i32, i32, i32, i32
  }
}

</mosaic_0001>

<llo_original>
// kernel: tpu_custom_call.1
$region0: #{tpu_custom_call.1}
  #allocation0 [shape = 'u32[]', space=smem, size = 0x4, offset = 0x4, fixed_abs, tag = 'smem constant byte address 0x4 - core index']
  #allocation1 [shape = 'u32[144,128]{1,0:T(1,128)}', space=vmem, size = 0x12000, scoped, tag = 'internal scratch']
  #allocation2 [shape = 'f32[16,256]{1,0:T(8,128)}', space=vmem, size = 0x4000, scoped, tag = 'scratch operand']
  %s0 = inlined_call_operand.hbm [shape: f32[2,4,8,256], index: 0, kind: input, shape index: {}]
  %s1 = inlined_call_operand.vmem [shape: f32[16,144], index: 1, kind: input, shape index: {}]
  %s2 = inlined_call_operand.vmem [shape: f32[8,72], index: 2, kind: input, shape index: {}]
  %s3 = inlined_call_operand.vmem [shape: f32[8,1], index: 3, kind: input, shape index: {}]
  %s4 = inlined_call_operand.vmem [shape: f32[8,1], index: 4, kind: input, shape index: {}]
  %s5 = inlined_call_operand.vmem [shape: f32[8,1], index: 5, kind: input, shape index: {}]
  %s6 = inlined_call_operand.vmem [shape: f32[8,1], index: 6, kind: input, shape index: {}]
  %s7 = inlined_call_operand.vmem [shape: f32[8,8], index: 7, kind: input, shape index: {}]
  %s8 = inlined_call_operand.hbm [shape: f32[144,256], index: 8, kind: input, shape index: {}]
  %s9 = inlined_call_operand.hbm [shape: f32[72,256], index: 9, kind: input, shape index: {}]
  %s10 = inlined_call_operand.vmem [shape: f32[8,1], index: 10, kind: input, shape index: {}]
  %s11 = inlined_call_operand.hbm [shape: f32[2,4,8,256], index: 11, kind: output, shape index: {}]
  %s12 = sld [smem:[#allocation0]]
  $region93: #{tpu_custom_call.1} parent=0
    _
  %s14 = ssub.s32 1, %s12
  %s15 = scalar_select 0, %s14, %s12
  $region1: #{tpu_custom_call.1} parent=0
    #allocation3 [shape = 'u8[16384]{0}', space=vmem, size = 0x4000, scoped, tag = 'input window, operand 0']
    #allocation4 [shape = 's32[2]{0}', space=sflag, size = 0x8, scoped, tag = 'scoped memory for tpu_custom_call.1']
    #allocation5 [shape = 's32[2]{0}', space=sflag, size = 0x8, scoped, tag = 'scoped memory for tpu_custom_call.1']
    #allocation6 [shape = 'u8[147456]{0}', space=vmem, size = 0x24000, scoped, tag = 'input window, operand 8, single buffered']
    #allocation7 [shape = 's32[1]{0}', space=sflag, size = 0x4, scoped, tag = 'scoped memory for tpu_custom_call.1']
    #allocation8 [shape = 'u8[73728]{0}', space=vmem, size = 0x12000, scoped, tag = 'input window, operand 9, single buffered']
    #allocation9 [shape = 'u8[16384]{0}', space=vmem, size = 0x4000, scoped, tag = 'output window, operand 0']
    %16 = vsyncpa [#allocation4], 0
    %s17 = scalar_lea.sflag [#allocation4], 1
    %18 = vsyncpa %s17, 0
    %19 = vsyncpa [#allocation7], 0
    %20 = vsyncpa [#allocation5], 0
    %s21 = scalar_lea.sflag [#allocation5], 1
    %22 = vsyncpa %s21, 0
    loop: start=0, step=1, limit=10
    $region2: #{tpu_custom_call.1} parent=1 // loop_pre_header
      _
    $region3: #{tpu_custom_call.1} parent=1 // loop_header
      %s24 = sphi 0, %s28
      %p25 = scmp.ge.s32.totalorder %s24, 10
      %s31 = sphi 0, %s43
      %s32 = sphi 0, %s39
      %s33 = sphi 0, %s31
      %s34 = sphi 0, %s32
      %s35 = sphi 0, %s33
      %s36 = sphi 0, %s34
      %s48 = sphi 0, %s50
      %s51 = sphi 0, %s48
      %s52 = sphi 0, %s51
      %s68 = sphi 0, %s52
      %s72 = sphi 0, %s72
      %s74 = sphi 0, %s72
      %s75 = sphi 0, %s74
      %s89 = sphi 0, %s75
      %s93 = sphi 0, %s93
      %s95 = sphi 0, %s93
      %s96 = sphi 0, %s95
      %s110 = sphi 0, %s96
      %s114 = sphi 0, %s114
      %s116 = sphi 0, %s114
      %s117 = sphi 0, %s116
      %s131 = sphi 0, %s117
      %s135 = sphi 0, %s135
      %s137 = sphi 0, %s135
      %s138 = sphi 0, %s137
      %s152 = sphi 0, %s138
      %s156 = sphi 0, %s156
      %s158 = sphi 0, %s156
      %s159 = sphi 0, %s158
      %s173 = sphi 0, %s159
      %s177 = sphi 0, %s177
      %s179 = sphi 0, %s177
      %s180 = sphi 0, %s179
      %s194 = sphi 0, %s180
      %s198 = sphi 0, %s198
      %s200 = sphi 0, %s198
      %s201 = sphi 0, %s200
      %s215 = sphi 0, %s201
      %s219 = sphi 0, %s219
      %s221 = sphi 0, %s219
      %s222 = sphi 0, %s221
      %s236 = sphi 0, %s222
      %s240 = sphi 0, %s240
      %s242 = sphi 0, %s240
      %s243 = sphi 0, %s242
      %s257 = sphi 0, %s243
      %s261 = sphi 0, %s261
      %s263 = sphi 0, %s261
      %s264 = sphi 0, %s263
      %s278 = sphi 0, %s264
      %s286 = sphi 0, %s288
      %s289 = sphi 0, %s286
      %s290 = sphi 0, %s289
      %s306 = sphi 0, %s290
    $region4: #{tpu_custom_call.1} parent=1 // loop_header_branch
      %27 = sbr.rel (%p25) target = $region8
    $region5: #{tpu_custom_call.1} parent=1 // loop_body
      %s29 = ssub.s32 %s24, 1
      %s30 = ssub.s32 %s24, 2
      %s37 = sadd.s32 1, %s32
      %p38 = scmp.ge.s32.totalorder %s37, 4
      %s39 = scalar_select %p38, 0, %s37
      %s40 = sadd.s32 1, %s31
      %s41 = scalar_select %p38, %s40, %s31
      %p42 = scmp.ge.s32.totalorder %s41, 2
      %s43 = scalar_select %p42, 0, %s41
      %s44 = ssub.s32 %s31, %s43
      %s45 = ssub.s32 %s32, %s39
      %s46 = sor.u32 %s44, %s45
      %p47 = scmp.eq.s32.totalorder %s46, 0
      %s49 = sadd.s32 %s48, 1
      %s50 = scalar_select %p47, %s48, %s49
      %p53 = pneg %p47
      %p54 = scmp.eq.s32.totalorder %s24, 7
      %p55 = por %p53, %p54
      %p56 = scmp.ne.s32.totalorder %s48, %s51
      %p57 = scmp.eq.s32.totalorder %s24, 0
      %p58 = por %p56, %p57
      %p59 = scmp.ne.s32.totalorder %s48, %s51
      %p60 = scmp.eq.s32.totalorder %s29, 7
      %p61 = por %p59, %p60
      %p62 = scmp.ne.s32.totalorder %s51, %s52
      %p63 = scmp.eq.s32.totalorder %s29, 0
      %p64 = por %p62, %p63
      %p65 = scmp.ne.s32.totalorder %s51, %s52
      %p66 = scmp.eq.s32.totalorder %s30, 7
      %p67 = por %p65, %p66
      %p69 = scmp.ne.s32.totalorder %s52, %s68
      %p70 = scmp.eq.s32.totalorder %s30, 0
      %p71 = por %p69, %p70
      %s73 = sadd.s32 %s72, 1
      %p76 = scmp.eq.s32.totalorder %s24, 7
      %p77 = scmp.ne.s32.totalorder %s72, %s74
      %p78 = scmp.eq.s32.totalorder %s24, 0
      %p79 = por %p77, %p78
      %p80 = scmp.ne.s32.totalorder %s72, %s74
      %p81 = scmp.eq.s32.totalorder %s29, 7
      %p82 = por %p80, %p81
      %p83 = scmp.ne.s32.totalorder %s74, %s75
      %p84 = scmp.eq.s32.totalorder %s29, 0
      %p85 = por %p83, %p84
      %p86 = scmp.ne.s32.totalorder %s74, %s75
      %p87 = scmp.eq.s32.totalorder %s30, 7
      %p88 = por %p86, %p87
      %p90 = scmp.ne.s32.totalorder %s75, %s89
      %p91 = scmp.eq.s32.totalorder %s30, 0
      %p92 = por %p90, %p91
      %s94 = sadd.s32 %s93, 1
      %p97 = scmp.eq.s32.totalorder %s24, 7
      %p98 = scmp.ne.s32.totalorder %s93, %s95
      %p99 = scmp.eq.s32.totalorder %s24, 0
      %p100 = por %p98, %p99
      %p101 = scmp.ne.s32.totalorder %s93, %s95
      %p102 = scmp.eq.s32.totalorder %s29, 7
      %p103 = por %p101, %p102
      %p104 = scmp.ne.s32.totalorder %s95, %s96
      %p105 = scmp.eq.s32.totalorder %s29, 0
      %p106 = por %p104, %p105
      %p107 = scmp.ne.s32.totalorder %s95, %s96
      %p108 = scmp.eq.s32.totalorder %s30, 7
      %p109 = por %p107, %p108
      %p111 = scmp.ne.s32.totalorder %s96, %s110
      %p112 = scmp.eq.s32.totalorder %s30, 0
      %p113 = por %p111, %p112
      %s115 = sadd.s32 %s114, 1
      %p118 = scmp.eq.s32.totalorder %s24, 7
      %p119 = scmp.ne.s32.totalorder %s114, %s116
      %p120 = scmp.eq.s32.totalorder %s24, 0
      %p121 = por %p119, %p120
      %p122 = scmp.ne.s32.totalorder %s114, %s116
      %p123 = scmp.eq.s32.totalorder %s29, 7
      %p124 = por %p122, %p123
      %p125 = scmp.ne.s32.totalorder %s116, %s117
      %p126 = scmp.eq.s32.totalorder %s29, 0
      %p127 = por %p125, %p126
      %p128 = scmp.ne.s32.totalorder %s116, %s117
      %p129 = scmp.eq.s32.totalorder %s30, 7
      %p130 = por %p128, %p129
      %p132 = scmp.ne.s32.totalorder %s117, %s131
      %p133 = scmp.eq.s32.totalorder %s30, 0
      %p134 = por %p132, %p133
      %s136 = sadd.s32 %s135, 1
      %p139 = scmp.eq.s32.totalorder %s24, 7
      %p140 = scmp.ne.s32.totalorder %s135, %s137
      %p141 = scmp.eq.s32.totalorder %s24, 0
      %p142 = por %p140, %p141
      %p143 = scmp.ne.s32.totalorder %s135, %s137
      %p144 = scmp.eq.s32.totalorder %s29, 7
      %p145 = por %p143, %p144
      %p146 = scmp.ne.s32.totalorder %s137, %s138
      %p147 = scmp.eq.s32.totalorder %s29, 0
      %p148 = por %p146, %p147
      %p149 = scmp.ne.s32.totalorder %s137, %s138
      %p150 = scmp.eq.s32.totalorder %s30, 7
      %p151 = por %p149, %p150
      %p153 = scmp.ne.s32.totalorder %s138, %s152
      %p154 = scmp.eq.s32.totalorder %s30, 0
      %p155 = por %p153, %p154
      %s157 = sadd.s32 %s156, 1
      %p160 = scmp.eq.s32.totalorder %s24, 7
      %p161 = scmp.ne.s32.totalorder %s156, %s158
      %p162 = scmp.eq.s32.totalorder %s24, 0
      %p163 = por %p161, %p162
      %p164 = scmp.ne.s32.totalorder %s156, %s158
      %p165 = scmp.eq.s32.totalorder %s29, 7
      %p166 = por %p164, %p165
      %p167 = scmp.ne.s32.totalorder %s158, %s159
      %p168 = scmp.eq.s32.totalorder %s29, 0
      %p169 = por %p167, %p168
      %p170 = scmp.ne.s32.totalorder %s158, %s159
      %p171 = scmp.eq.s32.totalorder %s30, 7
      %p172 = por %p170, %p171
      %p174 = scmp.ne.s32.totalorder %s159, %s173
      %p175 = scmp.eq.s32.totalorder %s30, 0
      %p176 = por %p174, %p175
      %s178 = sadd.s32 %s177, 1
      %p181 = scmp.eq.s32.totalorder %s24, 7
      %p182 = scmp.ne.s32.totalorder %s177, %s179
      %p183 = scmp.eq.s32.totalorder %s24, 0
      %p184 = por %p182, %p183
      %p185 = scmp.ne.s32.totalorder %s177, %s179
      %p186 = scmp.eq.s32.totalorder %s29, 7
      %p187 = por %p185, %p186
      %p188 = scmp.ne.s32.totalorder %s179, %s180
      %p189 = scmp.eq.s32.totalorder %s29, 0
      %p190 = por %p188, %p189
      %p191 = scmp.ne.s32.totalorder %s179, %s180
      %p192 = scmp.eq.s32.totalorder %s30, 7
      %p193 = por %p191, %p192
      %p195 = scmp.ne.s32.totalorder %s180, %s194
      %p196 = scmp.eq.s32.totalorder %s30, 0
      %p197 = por %p195, %p196
      %s199 = sadd.s32 %s198, 1
      %p202 = scmp.eq.s32.totalorder %s24, 7
      %p203 = scmp.ne.s32.totalorder %s198, %s200
      %p204 = scmp.eq.s32.totalorder %s24, 0
      %p205 = por %p203, %p204
      %p206 = scmp.ne.s32.totalorder %s198, %s200
      %p207 = scmp.eq.s32.totalorder %s29, 7
      %p208 = por %p206, %p207
      %p209 = scmp.ne.s32.totalorder %s200, %s201
      %p210 = scmp.eq.s32.totalorder %s29, 0
      %p211 = por %p209, %p210
      %p212 = scmp.ne.s32.totalorder %s200, %s201
      %p213 = scmp.eq.s32.totalorder %s30, 7
      %p214 = por %p212, %p213
      %p216 = scmp.ne.s32.totalorder %s201, %s215
      %p217 = scmp.eq.s32.totalorder %s30, 0
      %p218 = por %p216, %p217
      %s220 = sadd.s32 %s219, 1
      %p223 = scmp.eq.s32.totalorder %s24, 7
      %p224 = scmp.ne.s32.totalorder %s219, %s221
      %p225 = scmp.eq.s32.totalorder %s24, 0
      %p226 = por %p224, %p225
      %p227 = scmp.ne.s32.totalorder %s219, %s221
      %p228 = scmp.eq.s32.totalorder %s29, 7
      %p229 = por %p227, %p228
      %p230 = scmp.ne.s32.totalorder %s221, %s222
      %p231 = scmp.eq.s32.totalorder %s29, 0
      %p232 = por %p230, %p231
      %p233 = scmp.ne.s32.totalorder %s221, %s222
      %p234 = scmp.eq.s32.totalorder %s30, 7
      %p235 = por %p233, %p234
      %p237 = scmp.ne.s32.totalorder %s222, %s236
      %p238 = scmp.eq.s32.totalorder %s30, 0
      %p239 = por %p237, %p238
      %s241 = sadd.s32 %s240, 1
      %p244 = scmp.eq.s32.totalorder %s24, 7
      %p245 = scmp.ne.s32.totalorder %s240, %s242
      %p246 = scmp.eq.s32.totalorder %s24, 0
      %p247 = por %p245, %p246
      %p248 = scmp.ne.s32.totalorder %s240, %s242
      %p249 = scmp.eq.s32.totalorder %s29, 7
      %p250 = por %p248, %p249
      %p251 = scmp.ne.s32.totalorder %s242, %s243
      %p252 = scmp.eq.s32.totalorder %s29, 0
      %p253 = por %p251, %p252
      %p254 = scmp.ne.s32.totalorder %s242, %s243
      %p255 = scmp.eq.s32.totalorder %s30, 7
      %p256 = por %p254, %p255
      %p258 = scmp.ne.s32.totalorder %s243, %s257
      %p259 = scmp.eq.s32.totalorder %s30, 0
      %p260 = por %p258, %p259
      %s262 = sadd.s32 %s261, 1
      %p265 = scmp.eq.s32.totalorder %s24, 7
      %p266 = scmp.ne.s32.totalorder %s261, %s263
      %p267 = scmp.eq.s32.totalorder %s24, 0
      %p268 = por %p266, %p267
      %p269 = scmp.ne.s32.totalorder %s261, %s263
      %p270 = scmp.eq.s32.totalorder %s29, 7
      %p271 = por %p269, %p270
      %p272 = scmp.ne.s32.totalorder %s263, %s264
      %p273 = scmp.eq.s32.totalorder %s29, 0
      %p274 = por %p272, %p273
      %p275 = scmp.ne.s32.totalorder %s263, %s264
      %p276 = scmp.eq.s32.totalorder %s30, 7
      %p277 = por %p275, %p276
      %p279 = scmp.ne.s32.totalorder %s264, %s278
      %p280 = scmp.eq.s32.totalorder %s30, 0
      %p281 = por %p279, %p280
      %s282 = ssub.s32 %s31, %s43
      %s283 = ssub.s32 %s32, %s39
      %s284 = sor.u32 %s282, %s283
      %p285 = scmp.eq.s32.totalorder %s284, 0
      %s287 = sadd.s32 %s286, 1
      %s288 = scalar_select %p285, %s286, %s287
      %p291 = pneg %p285
      %p292 = scmp.eq.s32.totalorder %s24, 7
      %p293 = por %p291, %p292
      %p294 = scmp.ne.s32.totalorder %s286, %s289
      %p295 = scmp.eq.s32.totalorder %s24, 0
      %p296 = por %p294, %p295
      %p297 = scmp.ne.s32.totalorder %s286, %s289
      %p298 = scmp.eq.s32.totalorder %s29, 7
      %p299 = por %p297, %p298
      %p300 = scmp.ne.s32.totalorder %s289, %s290
      %p301 = scmp.eq.s32.totalorder %s29, 0
      %p302 = por %p300, %p301
      %p303 = scmp.ne.s32.totalorder %s289, %s290
      %p304 = scmp.eq.s32.totalorder %s30, 7
      %p305 = por %p303, %p304
      %p307 = scmp.ne.s32.totalorder %s290, %s306
      %p308 = scmp.eq.s32.totalorder %s30, 0
      %p309 = por %p307, %p308
      %p310 = scmp.le.s32.totalorder 1, %s24
      %p311 = scmp.lt.s32.totalorder %s24, 9
      %p312 = pnand %p310, %p311
      %p313 = pneg %p312
      // Predicated region
      $region9: #{tpu_custom_call.1} parent=5 // pred_check
        _
      $region10: #{tpu_custom_call.1} parent=5 // pred_check_branch
        %315 = sbr.rel (%p312) target = $region12
      $region11: #{tpu_custom_call.1} parent=5 // pred_region
        %s316 = ssub.s32 %s24, 1
        // Predicated region
        $region13: #{tpu_custom_call.1} parent=11 // pred_check
          %p317 = pneg %p85
        $region14: #{tpu_custom_call.1} parent=11 // pred_check_branch
          %319 = sbr.rel (%p317) target = $region16
        $region15: #{tpu_custom_call.1} parent=11 // pred_region
          _
        $region16: #{tpu_custom_call.1} parent=11 // pred_fallthru
          _
        // Predicated region
        $region17: #{tpu_custom_call.1} parent=11 // pred_check
          %p320 = pneg %p106
        $region18: #{tpu_custom_call.1} parent=11 // pred_check_branch
          %322 = sbr.rel (%p320) target = $region20
        $region19: #{tpu_custom_call.1} parent=11 // pred_region
          _
        $region20: #{tpu_custom_call.1} parent=11 // pred_fallthru
          _
        // Predicated region
        $region21: #{tpu_custom_call.1} parent=11 // pred_check
          %p323 = pneg %p127
        $region22: #{tpu_custom_call.1} parent=11 // pred_check_branch
          %325 = sbr.rel (%p323) target = $region24
        $region23: #{tpu_custom_call.1} parent=11 // pred_region
          _
        $region24: #{tpu_custom_call.1} parent=11 // pred_fallthru
          _
        // Predicated region
        $region25: #{tpu_custom_call.1} parent=11 // pred_check
          %p326 = pneg %p148
        $region26: #{tpu_custom_call.1} parent=11 // pred_check_branch
          %328 = sbr.rel (%p326) target = $region28
        $region27: #{tpu_custom_call.1} parent=11 // pred_region
          _
        $region28: #{tpu_custom_call.1} parent=11 // pred_fallthru
          _
        // Predicated region
        $region29: #{tpu_custom_call.1} parent=11 // pred_check
          %p329 = pneg %p169
        $region30: #{tpu_custom_call.1} parent=11 // pred_check_branch
          %331 = sbr.rel (%p329) target = $region32
        $region31: #{tpu_custom_call.1} parent=11 // pred_region
          _
        $region32: #{tpu_custom_call.1} parent=11 // pred_fallthru
          _
        // Predicated region
        $region33: #{tpu_custom_call.1} parent=11 // pred_check
          %p332 = pneg %p190
        $region34: #{tpu_custom_call.1} parent=11 // pred_check_branch
          %334 = sbr.rel (%p332) target = $region36
        $region35: #{tpu_custom_call.1} parent=11 // pred_region
          _
        $region36: #{tpu_custom_call.1} parent=11 // pred_fallthru
          _
        // Predicated region
        $region37: #{tpu_custom_call.1} parent=11 // pred_check
          %p335 = pneg %p211
        $region38: #{tpu_custom_call.1} parent=11 // pred_check_branch
          %337 = sbr.rel (%p335) target = $region40
        $region39: #{tpu_custom_call.1} parent=11 // pred_region
          _
        $region40: #{tpu_custom_call.1} parent=11 // pred_fallthru
          _
        // Predicated region
        $region41: #{tpu_custom_call.1} parent=11 // pred_check
          %p338 = pneg %p232
        $region42: #{tpu_custom_call.1} parent=11 // pred_check_branch
          %340 = sbr.rel (%p338) target = $region44
        $region43: #{tpu_custom_call.1} parent=11 // pred_region
          %s342 = ssub.s32 4608, 4608
          %343 = vsyncadd [#allocation7], %s342
          %s344 = sshll.u32 [#allocation6], 4
          %s345 = int_to_ptr.vmem [resolvable:$true] %s344
          %350 = dma.hbm_to_vmem [thread:$0]  %s8, 4608, %s345, [#allocation7], 256, 256, 16
        $region44: #{tpu_custom_call.1} parent=11 // pred_fallthru
          _
        // Predicated region
        $region45: #{tpu_custom_call.1} parent=11 // pred_check
          %p351 = pneg %p253
        $region46: #{tpu_custom_call.1} parent=11 // pred_check_branch
          %353 = sbr.rel (%p351) target = $region48
        $region47: #{tpu_custom_call.1} parent=11 // pred_region
          %s355 = ssub.s32 2304, 2304
          %356 = vsyncadd [#allocation7], %s355
          %s357 = sshll.u32 [#allocation8], 4
          %s358 = int_to_ptr.vmem [resolvable:$true] %s357
          %363 = dma.hbm_to_vmem [thread:$0]  %s9, 2304, %s358, [#allocation7], 256, 256, 16
        $region48: #{tpu_custom_call.1} parent=11 // pred_fallthru
          _
        // Predicated region
        $region49: #{tpu_custom_call.1} parent=11 // pred_check
          %p364 = pneg %p274
        $region50: #{tpu_custom_call.1} parent=11 // pred_check_branch
          %366 = sbr.rel (%p364) target = $region52
        $region51: #{tpu_custom_call.1} parent=11 // pred_region
          _
        $region52: #{tpu_custom_call.1} parent=11 // pred_fallthru
          _
      $region12: #{tpu_custom_call.1} parent=5 // pred_fallthru
        _
      %p367 = scmp.lt.s32.totalorder %s24, 8
      // Predicated region
      $region53: #{tpu_custom_call.1} parent=5 // pred_check
        %p368 = pneg %p367
      $region54: #{tpu_custom_call.1} parent=5 // pred_check_branch
        %370 = sbr.rel (%p368) target = $region56
      $region55: #{tpu_custom_call.1} parent=5 // pred_region
        // Predicated region
        $region57: #{tpu_custom_call.1} parent=55 // pred_check
          %p371 = pneg %p58
        $region58: #{tpu_custom_call.1} parent=55 // pred_check_branch
          %373 = sbr.rel (%p371) target = $region60
        $region59: #{tpu_custom_call.1} parent=55 // pred_region
          %s374 = sand.u32 %s48, 1
          %s375 = scalar_lea.sflag [#allocation4], %s374
          %s376 = sand.u32 %s48, 1
          %s377 = smul.addr %s376, 16
          %s378 = scalar_lea.vmem [#allocation3], %s377
          %s380 = ssub.s32 256, 256
          %381 = vsyncadd %s375, %s380
          %s382 = smul.addr %s32, 2
          %s383 = smul.addr %s31, 8
          %s384 = sadd.s32 %s382, %s383
          %s385 = smul.addr %s384, 128
          %s386 = scalar_lea.hbm %s0, %s385
          %s388 = sshll.u32 %s378, 4
          %s389 = int_to_ptr.vmem [resolvable:$true] %s388
          %391 = dma.hbm_to_vmem [thread:$0]  %s386, 256, %s389, %s375
        $region60: #{tpu_custom_call.1} parent=55 // pred_fallthru
          _
      $region56: #{tpu_custom_call.1} parent=5 // pred_fallthru
        _
      %p392 = scmp.le.s32.totalorder 1, %s24
      %p393 = scmp.lt.s32.totalorder %s24, 9
      %p394 = pnand %p392, %p393
      %p395 = pneg %p394
      // Predicated region
      $region61: #{tpu_custom_call.1} parent=5 // pred_check
        _
      $region62: #{tpu_custom_call.1} parent=5 // pred_check_branch
        %397 = sbr.rel (%p394) target = $region64
      $region63: #{tpu_custom_call.1} parent=5 // pred_region
        %s398 = ssub.s32 %s24, 1
        %s399 = sand.u32 %s51, 1
        %s400 = scalar_lea.sflag [#allocation4], %s399
        %s401 = sand.u32 %s51, 1
        %s402 = smul.addr %s401, 16
        %s403 = scalar_lea.vmem [#allocation3], %s402
        // Predicated region
        $region65: #{tpu_custom_call.1} parent=63 // pred_check
          %p404 = pneg %p64
        $region66: #{tpu_custom_call.1} parent=63 // pred_check_branch
          %406 = sbr.rel (%p404) target = $region68
        $region67: #{tpu_custom_call.1} parent=63 // pred_region
          %407 = dma.done %s400, 256
        $region68: #{tpu_custom_call.1} parent=63 // pred_fallthru
          _
        // Predicated region
        $region69: #{tpu_custom_call.1} parent=63 // pred_check
          %p408 = pneg %p232
        $region70: #{tpu_custom_call.1} parent=63 // pred_check_branch
          %410 = sbr.rel (%p408) target = $region72
        $region71: #{tpu_custom_call.1} parent=63 // pred_region
          %411 = dma.done [#allocation7], 4608
        $region72: #{tpu_custom_call.1} parent=63 // pred_fallthru
          _
        // Predicated region
        $region73: #{tpu_custom_call.1} parent=63 // pred_check
          %p412 = pneg %p253
        $region74: #{tpu_custom_call.1} parent=63 // pred_check_branch
          %414 = sbr.rel (%p412) target = $region76
        $region75: #{tpu_custom_call.1} parent=63 // pred_region
          %415 = dma.done [#allocation7], 2304
        $region76: #{tpu_custom_call.1} parent=63 // pred_fallthru
          _
        %s416 = sand.u32 %s51, 1
        %s417 = scalar_lea.sflag [#allocation4], %s416
        %s418 = sand.u32 %s51, 1
        %s419 = smul.addr %s418, 16
        %s420 = scalar_lea.vmem [#allocation3], %s419
        %p421 = pneg %p64
        %p422 = pneg %p61
        %p423 = pneg %p85
        %p424 = pneg %p82
        %p425 = pneg %p106
        %p426 = pneg %p103
        %p427 = pneg %p127
        %p428 = pneg %p124
        %p429 = pneg %p148
        %p430 = pneg %p145
        %p431 = pneg %p169
        %p432 = pneg %p166
        %p433 = pneg %p190
        %p434 = pneg %p187
        %p435 = pneg %p211
        %p436 = pneg %p208
        %p437 = pneg %p232
        %p438 = pneg %p229
        %p439 = pneg %p253
        %p440 = pneg %p250
        %p441 = pneg %p274
        %p442 = pneg %p271
        %p443 = pneg %p302
        %p444 = pneg %p299
        %s445 = sand.u32 %s289, 1
        %s446 = scalar_lea.sflag [#allocation5], %s445
        %s447 = sand.u32 %s289, 1
        %s448 = smul.addr %s447, 16
        %s449 = scalar_lea.vmem [#allocation9], %s448
        %p450 = scmp.eq.s32.totalorder %s34, 0
        // Predicated region
        $region77: #{tpu_custom_call.1} parent=63 // pred_check
          %p451 = pneg %p450
        $region78: #{tpu_custom_call.1} parent=63 // pred_check_branch
          %453 = sbr.rel (%p451) target = $region80
        $region79: #{tpu_custom_call.1} parent=63 // pred_region
          %v454 = vld [vmem:[%s10] sm:$0xff]
          %456 = vset.pattern.permute.xlu0 0
          %457 = vperm.xlu0 %456, %v454
          %v458 = vpop.permute.xlu0 %457
          %460 = vst [vmem:[#allocation2 + $0x10] sm:$0xff] %v458
          %461 = vst [vmem:[#allocation2 + $0x18] sm:$0xff] %v458
        $region80: #{tpu_custom_call.1} parent=63 // pred_fallthru
          _
        %v462 = vld [vmem:[%s403] sm:$0xff]
        %v463 = vld [vmem:[%s403 + $0x8] sm:$0xff]
        %464 = vst [vmem:[#allocation2] sm:$0xff] %v462
        %465 = vst [vmem:[#allocation2 + $0x8] sm:$0xff] %v463
        %v466 = vld [vmem:[#allocation2] sm:$0xff]
        %v467 = vld [vmem:[#allocation2 + $0x8] sm:$0xff]
        %v468 = vld [vmem:[#allocation2 + $0x10] sm:$0xff]
        %v469 = vld [vmem:[#allocation2 + $0x18] sm:$0xff]
        %472 = vrot.lane.b32.xlu0 %v467, 17
        %v473 = vpop.permute.xlu0 %472
        %474 = vrot.lane.b32.xlu0 %v469, 17
        %v475 = vpop.permute.xlu0 %474
        %480 = vrot.lane.b32.xlu0 %v466, 17
        %v481 = vpop.permute.xlu0 %480
        %482 = vrot.lane.b32.xlu0 %v468, 17
        %v483 = vpop.permute.xlu0 %482
        %vm484 = vcmask 138240
        %v485 = vsel %vm484, %v481, %v473
        %v486 = vsel %vm484, %v483, %v475
        %v491 = vsel %vm484, %v473, %v481
        %v492 = vsel %vm484, %v475, %v483
        %493 = vrot.lane.b32.xlu0 %v467, 16
        %v494 = vpop.permute.xlu0 %493
        %495 = vrot.lane.b32.xlu0 %v469, 16
        %v496 = vpop.permute.xlu0 %495
        %499 = vrot.lane.b32.xlu0 %v466, 16
        %v500 = vpop.permute.xlu0 %499
        %501 = vrot.lane.b32.xlu0 %v468, 16
        %v502 = vpop.permute.xlu0 %501
        %vm503 = vcmask 130048
        %v504 = vsel %vm503, %v500, %v494
        %v505 = vsel %vm503, %v502, %v496
        %v510 = vsel %vm503, %v494, %v500
        %v511 = vsel %vm503, %v496, %v502
        %512 = vrot.lane.b32.xlu0 %v467, 15
        %v513 = vpop.permute.xlu0 %512
        %514 = vrot.lane.b32.xlu0 %v469, 15
        %v515 = vpop.permute.xlu0 %514
        %518 = vrot.lane.b32.xlu0 %v466, 15
        %v519 = vpop.permute.xlu0 %518
        %520 = vrot.lane.b32.xlu0 %v468, 15
        %v521 = vpop.permute.xlu0 %520
        %vm522 = vcmask 121856
        %v523 = vsel %vm522, %v519, %v513
        %v524 = vsel %vm522, %v521, %v515
        %v529 = vsel %vm522, %v513, %v519
        %v530 = vsel %vm522, %v515, %v521
        %531 = vrot.lane.b32.xlu0 %v467, 1
        %v532 = vpop.permute.xlu0 %531
        %533 = vrot.lane.b32.xlu0 %v469, 1
        %v534 = vpop.permute.xlu0 %533
        %537 = vrot.lane.b32.xlu0 %v466, 1
        %v538 = vpop.permute.xlu0 %537
        %539 = vrot.lane.b32.xlu0 %v468, 1
        %v540 = vpop.permute.xlu0 %539
        %vm541 = vcmask 7168
        %v542 = vsel %vm541, %v538, %v532
        %v543 = vsel %vm541, %v540, %v534
        %v548 = vsel %vm541, %v532, %v538
        %v549 = vsel %vm541, %v534, %v540
        %550 = vrot.lane.b32.xlu0 %v466, 127
        %v551 = vpop.permute.xlu0 %550
        %552 = vrot.lane.b32.xlu0 %v467, 127
        %v553 = vpop.permute.xlu0 %552
        %554 = vrot.lane.b32.xlu0 %v468, 127
        %v555 = vpop.permute.xlu0 %554
        %556 = vrot.lane.b32.xlu0 %v469, 127
        %v557 = vpop.permute.xlu0 %556
        %vm558 = vcmask 1039360
        %v559 = vsel %vm558, %v551, %v553
        %v560 = vsel %vm558, %v555, %v557
        %v567 = vsel %vm558, %v553, %v551
        %v568 = vsel %vm558, %v557, %v555
        %569 = vrot.lane.b32.xlu0 %v466, 113
        %v570 = vpop.permute.xlu0 %569
        %571 = vrot.lane.b32.xlu0 %v467, 113
        %v572 = vpop.permute.xlu0 %571
        %573 = vrot.lane.b32.xlu0 %v468, 113
        %v574 = vpop.permute.xlu0 %573
        %575 = vrot.lane.b32.xlu0 %v469, 113
        %v576 = vpop.permute.xlu0 %575
        %vm577 = vcmask 924672
        %v578 = vsel %vm577, %v570, %v572
        %v579 = vsel %vm577, %v574, %v576
        %v586 = vsel %vm577, %v572, %v570
        %v587 = vsel %vm577, %v576, %v574
        %588 = vrot.lane.b32.xlu0 %v466, 112
        %v589 = vpop.permute.xlu0 %588
        %590 = vrot.lane.b32.xlu0 %v467, 112
        %v591 = vpop.permute.xlu0 %590
        %592 = vrot.lane.b32.xlu0 %v468, 112
        %v593 = vpop.permute.xlu0 %592
        %594 = vrot.lane.b32.xlu0 %v469, 112
        %v595 = vpop.permute.xlu0 %594
        %vm596 = vcmask 916480
        %v597 = vsel %vm596, %v589, %v591
        %v598 = vsel %vm596, %v593, %v595
        %v605 = vsel %vm596, %v591, %v589
        %v606 = vsel %vm596, %v595, %v593
        %607 = vrot.lane.b32.xlu0 %v466, 111
        %v608 = vpop.permute.xlu0 %607
        %609 = vrot.lane.b32.xlu0 %v467, 111
        %v610 = vpop.permute.xlu0 %609
        %611 = vrot.lane.b32.xlu0 %v468, 111
        %v612 = vpop.permute.xlu0 %611
        %613 = vrot.lane.b32.xlu0 %v469, 111
        %v614 = vpop.permute.xlu0 %613
        %vm615 = vcmask 908288
        %v616 = vsel %vm615, %v608, %v610
        %v617 = vsel %vm615, %v612, %v614
        %v624 = vsel %vm615, %v610, %v608
        %v625 = vsel %vm615, %v614, %v612
        %v626 = vld [vmem:[#allocation6] sm:$0xff]
        %v627 = vld [vmem:[#allocation6 + $0x8] sm:$0xff]
        %v628 = vld [vmem:[#allocation6 + $0x10] sm:$0xff]
        %v629 = vld [vmem:[#allocation6 + $0x18] sm:$0xff]
        %v630 = vld [vmem:[#allocation6 + $0x20] sm:$0xff]
        %v631 = vld [vmem:[#allocation6 + $0x28] sm:$0xff]
        %v632 = vld [vmem:[#allocation6 + $0x30] sm:$0xff]
        %v633 = vld [vmem:[#allocation6 + $0x38] sm:$0xff]
        %v634 = vld [vmem:[#allocation6 + $0x40] sm:$0xff]
        %v635 = vld [vmem:[#allocation6 + $0x48] sm:$0xff]
        %v636 = vld [vmem:[#allocation6 + $0x50] sm:$0xff]
        %v637 = vld [vmem:[#allocation6 + $0x58] sm:$0xff]
        %v638 = vld [vmem:[#allocation6 + $0x60] sm:$0xff]
        %v639 = vld [vmem:[#allocation6 + $0x68] sm:$0xff]
        %v640 = vld [vmem:[#allocation6 + $0x70] sm:$0xff]
        %v641 = vld [vmem:[#allocation6 + $0x78] sm:$0xff]
        %v642 = vld [vmem:[#allocation6 + $0x80] sm:$0xff]
        %v643 = vld [vmem:[#allocation6 + $0x88] sm:$0xff]
        %v644 = vld [vmem:[#allocation6 + $0x90] sm:$0xff]
        %v645 = vld [vmem:[#allocation6 + $0x98] sm:$0xff]
        %v646 = vld [vmem:[#allocation6 + $0xa0] sm:$0xff]
        %v647 = vld [vmem:[#allocation6 + $0xa8] sm:$0xff]
        %v648 = vld [vmem:[#allocation6 + $0xb0] sm:$0xff]
        %v649 = vld [vmem:[#allocation6 + $0xb8] sm:$0xff]
        %v650 = vld [vmem:[#allocation6 + $0xc0] sm:$0xff]
        %v651 = vld [vmem:[#allocation6 + $0xc8] sm:$0xff]
        %v652 = vld [vmem:[#allocation6 + $0xd0] sm:$0xff]
        %v653 = vld [vmem:[#allocation6 + $0xd8] sm:$0xff]
        %v654 = vld [vmem:[#allocation6 + $0xe0] sm:$0xff]
        %v655 = vld [vmem:[#allocation6 + $0xe8] sm:$0xff]
        %v656 = vld [vmem:[#allocation6 + $0xf0] sm:$0xff]
        %v657 = vld [vmem:[#allocation6 + $0xf8] sm:$0xff]
        %v658 = vld [vmem:[#allocation6 + $0x100] sm:$0xff]
        %v659 = vld [vmem:[#allocation6 + $0x108] sm:$0xff]
        %v660 = vld [vmem:[#allocation6 + $0x110] sm:$0xff]
        %v661 = vld [vmem:[#allocation6 + $0x118] sm:$0xff]
        %v662 = vmul.f32 %v491, %v626
        %v663 = vmul.f32 %v485, %v627
        %v664 = vmul.f32 %v492, %v628
        %v665 = vmul.f32 %v486, %v629
        %v666 = vmul.f32 %v510, %v630
        %v667 = vmul.f32 %v504, %v631
        %v668 = vmul.f32 %v511, %v632
        %v669 = vmul.f32 %v505, %v633
        %v670 = vmul.f32 %v529, %v634
        %v671 = vmul.f32 %v523, %v635
        %v672 = vmul.f32 %v530, %v636
        %v673 = vmul.f32 %v524, %v637
        %v674 = vmul.f32 %v548, %v638
        %v675 = vmul.f32 %v542, %v639
        %v676 = vmul.f32 %v549, %v640
        %v677 = vmul.f32 %v543, %v641
        %v678 = vmul.f32 %v466, %v642
        %v679 = vmul.f32 %v467, %v643
        %v680 = vmul.f32 %v468, %v644
        %v681 = vmul.f32 %v469, %v645
        %v682 = vmul.f32 %v559, %v646
        %v683 = vmul.f32 %v567, %v647
        %v684 = vmul.f32 %v560, %v648
        %v685 = vmul.f32 %v568, %v649
        %v686 = vmul.f32 %v578, %v650
        %v687 = vmul.f32 %v586, %v651
        %v688 = vmul.f32 %v579, %v652
        %v689 = vmul.f32 %v587, %v653
        %v690 = vmul.f32 %v597, %v654
        %v691 = vmul.f32 %v605, %v655
        %v692 = vmul.f32 %v598, %v656
        %v693 = vmul.f32 %v606, %v657
        %v694 = vmul.f32 %v616, %v658
        %v695 = vmul.f32 %v624, %v659
        %v696 = vmul.f32 %v617, %v660
        %v697 = vmul.f32 %v625, %v661
        %v698 = vld [vmem:[%s1] sm:$0xff]
        %v699 = vld [vmem:[%s1 + $0x8] sm:$0xff]
        %v700 = vld [vmem:[%s1 + $0x10] sm:$0xff]
        %v701 = vld [vmem:[%s1 + $0x18] sm:$0xff]
        %v703 = vsel %vm503, %v699, 0
        %v706 = vsel %vm503, %v701, 0
        %708 = vmatprep.subr.mxu0 %v663
        %709 = vmatpush1.msra.mxu0 %v662
        %710 = vmatprep.subr.mxu0 %v665
        %711 = vmatpush1.msra.mxu0 %v664
        %712 = vmatprep.subr.mxu0 %v667
        %713 = vmatpush1.msra.mxu0 %v666
        %714 = vmatprep.subr.mxu0 %v669
        %715 = vmatpush1.msra.mxu0 %v668
        %716 = vmatprep.subr.mxu0 %v671
        %717 = vmatpush1.msra.mxu0 %v670
        %718 = vmatprep.subr.mxu0 %v673
        %719 = vmatpush1.msra.mxu0 %v672
        %720 = vmatprep.subr.mxu0 %v675
        %721 = vmatpush1.msra.mxu0 %v674
        %722 = vmatprep.subr.mxu0 %v677
        %723 = vmatpush1.msra.mxu0 %v676
        %724 = vmatprep.subr.mxu0 %v679
        %725 = vmatpush1.msra.mxu0 %v678
        %726 = vmatprep.subr.mxu0 %v681
        %727 = vmatpush1.msra.mxu0 %v680
        %728 = vmatprep.subr.mxu0 %v683
        %729 = vmatpush1.msra.mxu0 %v682
        %730 = vmatprep.subr.mxu0 %v685
        %731 = vmatpush1.msra.mxu0 %v684
        %732 = vmatprep.subr.mxu0 %v687
        %733 = vmatpush1.msra.mxu0 %v686
        %734 = vmatprep.subr.mxu0 %v689
        %735 = vmatpush1.msra.mxu0 %v688
        %736 = vmatprep.subr.mxu0 %v691
        %737 = vmatpush1.msra.mxu0 %v690
        %738 = vmatprep.subr.mxu0 %v693
        %739 = vmatpush1.msra.mxu0 %v692
        %740 = vmatprep.subr.mxu0 %v695
        %741 = vmatpush1.msra.mxu0 %v694
        %742 = vmatprep.subr.mxu0 %v697
        %743 = vmatpush1.msra.mxu0 %v696
        %744 = vmatprep.subr.mxu0 0.0
        %745 = vmatpush1.msra.mxu0 0.0
        %746 = vmatprep.subr.mxu0 0.0
        %747 = vmatpush1.msra.mxu0 0.0
        %748 = vmatprep.subr.mxu0 0.0
        %749 = vmatpush1.msra.mxu0 0.0
        %750 = vmatprep.subr.mxu0 0.0
        %751 = vmatpush1.msra.mxu0 0.0
        %752 = vmatprep.subr.mxu0 0.0
        %753 = vmatpush1.msra.mxu0 0.0
        %754 = vmatprep.subr.mxu0 0.0
        %755 = vmatpush1.msra.mxu0 0.0
        %756 = vmatprep.subr.mxu0 0.0
        %757 = vmatpush1.msra.mxu0 0.0
        %758 = vmatprep.subr.mxu0 0.0
        %759 = vmatpush1.msra.mxu0 0.0
        %760 = vmatprep.subr.mxu0 0.0
        %761 = vmatpush1.msra.mxu0 0.0
        %762 = vmatprep.subr.mxu0 0.0
        %763 = vmatpush1.msra.mxu0 0.0
        %764 = vmatprep.subr.mxu0 0.0
        %765 = vmatpush1.msra.mxu0 0.0
        %766 = vmatprep.subr.mxu0 0.0
        %767 = vmatpush1.msra.mxu0 0.0
        %768 = vmatprep.subr.mxu0 0.0
        %769 = vmatpush1.msra.mxu0 0.0
        %770 = vmatprep.subr.mxu0 0.0
        %771 = vmatpush1.msra.mxu0 0.0
        %772 = vmatprep.mubr.f32.mxu0 %v703
        %773 = vmatmul.mubr.f32.gmra.mrb[0].mxu0 %v698
        %v774 = vpop.f32.mrb[0].mxu0
        %v775 = vadd.f32 0.0, %v774
        %v776 = vpop.f32.mrb[0].mxu0
        %v777 = vadd.f32 0.0, %v776
        %778 = vmatprep.mubr.f32.mxu0 %v706
        %779 = vmatmul.mubr.f32.gmra.mrb[0].mxu0 %v700
        %v780 = vpop.f32.mrb[0].mxu0
        %v781 = vadd.f32 0.0, %v780
        %v782 = vpop.f32.mrb[0].mxu0
        %v783 = vadd.f32 0.0, %v782
        %784 = vdwg.mxu0
        %v785 = vld [vmem:[%s3] sm:$0xff]
        %787 = vset.pattern.permute.xlu0 0
        %788 = vperm.xlu0 %787, %v785
        %v789 = vpop.permute.xlu0 %788
        %v791 = vadd.f32 %v775, %v789
        %v792 = vadd.f32 %v777, %v789
        %v793 = vxor.u32 %v791, 2147483648
        %v794 = vxor.u32 %v792, 2147483648
        %v795 = vmul.f32 %v793, 1.442695
        %v796 = vpow.pop %v795
        %v797 = vmul.f32 %v794, 1.442695
        %v798 = vpow.pop %v797
        %v799 = vadd.f32 %v796, 1.0
        %v800 = vadd.f32 %v798, 1.0
        %v801 = vrcp.pop %v799
        %v802 = vmul.f32 1.0, %v801
        %v803 = vrcp.pop %v800
        %v804 = vmul.f32 1.0, %v803
        %v805 = vmul.f32 %v802, %v468
        %v806 = vmul.f32 %v804, %v469
        %808 = vrot.lane.b32.xlu0 %v806, 17
        %v809 = vpop.permute.xlu0 %808
        %812 = vrot.lane.b32.xlu0 %v805, 17
        %v813 = vpop.permute.xlu0 %812
        %v814 = vsel %vm484, %v813, %v809
        %v817 = vsel %vm484, %v809, %v813
        %818 = vrot.lane.b32.xlu0 %v806, 16
        %v819 = vpop.permute.xlu0 %818
        %821 = vrot.lane.b32.xlu0 %v805, 16
        %v822 = vpop.permute.xlu0 %821
        %v823 = vsel %vm503, %v822, %v819
        %v826 = vsel %vm503, %v819, %v822
        %827 = vrot.lane.b32.xlu0 %v806, 15
        %v828 = vpop.permute.xlu0 %827
        %830 = vrot.lane.b32.xlu0 %v805, 15
        %v831 = vpop.permute.xlu0 %830
        %v832 = vsel %vm522, %v831, %v828
        %v835 = vsel %vm522, %v828, %v831
        %836 = vrot.lane.b32.xlu0 %v806, 1
        %v837 = vpop.permute.xlu0 %836
        %839 = vrot.lane.b32.xlu0 %v805, 1
        %v840 = vpop.permute.xlu0 %839
        %v841 = vsel %vm541, %v840, %v837
        %v844 = vsel %vm541, %v837, %v840
        %845 = vrot.lane.b32.xlu0 %v805, 127
        %v846 = vpop.permute.xlu0 %845
        %847 = vrot.lane.b32.xlu0 %v806, 127
        %v848 = vpop.permute.xlu0 %847
        %v849 = vsel %vm558, %v846, %v848
        %v853 = vsel %vm558, %v848, %v846
        %854 = vrot.lane.b32.xlu0 %v805, 113
        %v855 = vpop.permute.xlu0 %854
        %856 = vrot.lane.b32.xlu0 %v806, 113
        %v857 = vpop.permute.xlu0 %856
        %v858 = vsel %vm577, %v855, %v857
        %v862 = vsel %vm577, %v857, %v855
        %863 = vrot.lane.b32.xlu0 %v805, 112
        %v864 = vpop.permute.xlu0 %863
        %865 = vrot.lane.b32.xlu0 %v806, 112
        %v866 = vpop.permute.xlu0 %865
        %v867 = vsel %vm596, %v864, %v866
        %v871 = vsel %vm596, %v866, %v864
        %872 = vrot.lane.b32.xlu0 %v805, 111
        %v873 = vpop.permute.xlu0 %872
        %874 = vrot.lane.b32.xlu0 %v806, 111
        %v875 = vpop.permute.xlu0 %874
        %v876 = vsel %vm615, %v873, %v875
        %v880 = vsel %vm615, %v875, %v873
        %v881 = vld [vmem:[#allocation8] sm:$0xff]
        %v882 = vld [vmem:[#allocation8 + $0x8] sm:$0xff]
        %v883 = vld [vmem:[#allocation8 + $0x10] sm:$0xff]
        %v884 = vld [vmem:[#allocation8 + $0x18] sm:$0xff]
        %v885 = vld [vmem:[#allocation8 + $0x20] sm:$0xff]
        %v886 = vld [vmem:[#allocation8 + $0x28] sm:$0xff]
        %v887 = vld [vmem:[#allocation8 + $0x30] sm:$0xff]
        %v888 = vld [vmem:[#allocation8 + $0x38] sm:$0xff]
        %v889 = vld [vmem:[#allocation8 + $0x40] sm:$0xff]
        %v890 = vld [vmem:[#allocation8 + $0x48] sm:$0xff]
        %v891 = vld [vmem:[#allocation8 + $0x50] sm:$0xff]
        %v892 = vld [vmem:[#allocation8 + $0x58] sm:$0xff]
        %v893 = vld [vmem:[#allocation8 + $0x60] sm:$0xff]
        %v894 = vld [vmem:[#allocation8 + $0x68] sm:$0xff]
        %v895 = vld [vmem:[#allocation8 + $0x70] sm:$0xff]
        %v896 = vld [vmem:[#allocation8 + $0x78] sm:$0xff]
        %v897 = vld [vmem:[#allocation8 + $0x80] sm:$0xff]
        %v898 = vld [vmem:[#allocation8 + $0x88] sm:$0xff]
        %v899 = vmul.f32 %v817, %v881
        %v900 = vmul.f32 %v814, %v882
        %v901 = vmul.f32 %v826, %v883
        %v902 = vmul.f32 %v823, %v884
        %v903 = vmul.f32 %v835, %v885
        %v904 = vmul.f32 %v832, %v886
        %v905 = vmul.f32 %v844, %v887
        %v906 = vmul.f32 %v841, %v888
        %v907 = vmul.f32 %v805, %v889
        %v908 = vmul.f32 %v806, %v890
        %v909 = vmul.f32 %v849, %v891
        %v910 = vmul.f32 %v853, %v892
        %v911 = vmul.f32 %v858, %v893
        %v912 = vmul.f32 %v862, %v894
        %v913 = vmul.f32 %v867, %v895
        %v914 = vmul.f32 %v871, %v896
        %v915 = vmul.f32 %v876, %v897
        %v916 = vmul.f32 %v880, %v898
        %v917 = vld [vmem:[%s2] sm:$0xff]
        %vm918 = vcmask 588800
        %v920 = vsel %vm918, %v917, 0
        %922 = vmatprep.subr.mxu0 %v900
        %923 = vmatpush1.msra.mxu0 %v899
        %924 = vmatprep.subr.mxu0 %v902
        %925 = vmatpush1.msra.mxu0 %v901
        %926 = vmatprep.subr.mxu0 %v904
        %927 = vmatpush1.msra.mxu0 %v903
        %928 = vmatprep.subr.mxu0 %v906
        %929 = vmatpush1.msra.mxu0 %v905
        %930 = vmatprep.subr.mxu0 %v908
        %931 = vmatpush1.msra.mxu0 %v907
        %932 = vmatprep.subr.mxu0 %v910
        %933 = vmatpush1.msra.mxu0 %v909
        %934 = vmatprep.subr.mxu0 %v912
        %935 = vmatpush1.msra.mxu0 %v911
        %936 = vmatprep.subr.mxu0 %v914
        %937 = vmatpush1.msra.mxu0 %v913
        %938 = vmatprep.subr.mxu0 %v916
        %939 = vmatpush1.msra.mxu0 %v915
        %940 = vmatprep.subr.mxu0 0.0
        %941 = vmatpush1.msra.mxu0 0.0
        %942 = vmatprep.subr.mxu0 0.0
        %943 = vmatpush1.msra.mxu0 0.0
        %944 = vmatprep.subr.mxu0 0.0
        %945 = vmatpush1.msra.mxu0 0.0
        %946 = vmatprep.subr.mxu0 0.0
        %947 = vmatpush1.msra.mxu0 0.0
        %948 = vmatprep.subr.mxu0 0.0
        %949 = vmatpush1.msra.mxu0 0.0
        %950 = vmatprep.subr.mxu0 0.0
        %951 = vmatpush1.msra.mxu0 0.0
        %952 = vmatprep.subr.mxu0 0.0
        %953 = vmatpush1.msra.mxu0 0.0
        %954 = vmatprep.subr.mxu0 0.0
        %955 = vmatpush1.msra.mxu0 0.0
        %956 = vmatprep.subr.mxu0 0.0
        %957 = vmatpush1.msra.mxu0 0.0
        %958 = vmatprep.subr.mxu0 0.0
        %959 = vmatpush1.msra.mxu0 0.0
        %960 = vmatprep.subr.mxu0 0.0
        %961 = vmatpush1.msra.mxu0 0.0
        %962 = vmatprep.subr.mxu0 0.0
        %963 = vmatpush1.msra.mxu0 0.0
        %964 = vmatprep.subr.mxu0 0.0
        %965 = vmatpush1.msra.mxu0 0.0
        %966 = vmatprep.subr.mxu0 0.0
        %967 = vmatpush1.msra.mxu0 0.0
        %968 = vmatprep.subr.mxu0 0.0
        %969 = vmatpush1.msra.mxu0 0.0
        %970 = vmatprep.subr.mxu0 0.0
        %971 = vmatpush1.msra.mxu0 0.0
        %972 = vmatprep.subr.mxu0 0.0
        %973 = vmatpush1.msra.mxu0 0.0
        %974 = vmatprep.subr.mxu0 0.0
        %975 = vmatpush1.msra.mxu0 0.0
        %976 = vmatprep.subr.mxu0 0.0
        %977 = vmatpush1.msra.mxu0 0.0
        %978 = vmatprep.subr.mxu0 0.0
        %979 = vmatpush1.msra.mxu0 0.0
        %980 = vmatprep.subr.mxu0 0.0
        %981 = vmatpush1.msra.mxu0 0.0
        %982 = vmatprep.subr.mxu0 0.0
        %983 = vmatpush1.msra.mxu0 0.0
        %984 = vmatprep.subr.mxu0 0.0
        %985 = vmatpush1.msra.mxu0 0.0
        %986 = vmatprep.mubr.f32.mxu0 0.0
        %987 = vmatmul.mubr.f32.gmra.mrb[0].mxu0 %v920
        %v988 = vpop.f32.mrb[0].mxu0
        %v989 = vadd.f32 0.0, %v988
        %v990 = vpop.f32.mrb[0].mxu0
        %v991 = vadd.f32 0.0, %v990
        %992 = vdwg.mxu0
        %v993 = vadd.f32 %v781, %v989
        %v994 = vadd.f32 %v783, %v991
        %v995 = vld [vmem:[%s4] sm:$0xff]
        %997 = vset.pattern.permute.xlu0 0
        %998 = vperm.xlu0 %997, %v995
        %v999 = vpop.permute.xlu0 %998
        %v1001 = vadd.f32 %v993, %v999
        %v1002 = vadd.f32 %v994, %v999
        %v1003 = vld [vmem:[%s7] sm:$0xff]
        %vm1004 = vcmask 64512
        %v1006 = vsel %vm1004, %v1003, 0
        %1008 = vmatprep.subr.mxu0 %v1002
        %1009 = vmatpush1.msra.mxu0 %v1001
        %1010 = vmatprep.subr.mxu0 0.0
        %1011 = vmatpush1.msra.mxu0 0.0
        %1012 = vmatprep.subr.mxu0 0.0
        %1013 = vmatpush1.msra.mxu0 0.0
        %1014 = vmatprep.subr.mxu0 0.0
        %1015 = vmatpush1.msra.mxu0 0.0
        %1016 = vmatprep.subr.mxu0 0.0
        %1017 = vmatpush1.msra.mxu0 0.0
        %1018 = vmatprep.subr.mxu0 0.0
        %1019 = vmatpush1.msra.mxu0 0.0
        %1020 = vmatprep.subr.mxu0 0.0
        %1021 = vmatpush1.msra.mxu0 0.0
        %1022 = vmatprep.subr.mxu0 0.0
        %1023 = vmatpush1.msra.mxu0 0.0
        %1024 = vmatprep.subr.mxu0 0.0
        %1025 = vmatpush1.msra.mxu0 0.0
        %1026 = vmatprep.subr.mxu0 0.0
        %1027 = vmatpush1.msra.mxu0 0.0
        %1028 = vmatprep.subr.mxu0 0.0
        %1029 = vmatpush1.msra.mxu0 0.0
        %1030 = vmatprep.subr.mxu0 0.0
        %1031 = vmatpush1.msra.mxu0 0.0
        %1032 = vmatprep.subr.mxu0 0.0
        %1033 = vmatpush1.msra.mxu0 0.0
        %1034 = vmatprep.subr.mxu0 0.0
        %1035 = vmatpush1.msra.mxu0 0.0
        %1036 = vmatprep.subr.mxu0 0.0
        %1037 = vmatpush1.msra.mxu0 0.0
        %1038 = vmatprep.subr.mxu0 0.0
        %1039 = vmatpush1.msra.mxu0 0.0
        %1040 = vmatprep.subr.mxu0 0.0
        %1041 = vmatpush1.msra.mxu0 0.0
        %1042 = vmatprep.subr.mxu0 0.0
        %1043 = vmatpush1.msra.mxu0 0.0
        %1044 = vmatprep.subr.mxu0 0.0
        %1045 = vmatpush1.msra.mxu0 0.0
        %1046 = vmatprep.subr.mxu0 0.0
        %1047 = vmatpush1.msra.mxu0 0.0
        %1048 = vmatprep.subr.mxu0 0.0
        %1049 = vmatpush1.msra.mxu0 0.0
        %1050 = vmatprep.subr.mxu0 0.0
        %1051 = vmatpush1.msra.mxu0 0.0
        %1052 = vmatprep.subr.mxu0 0.0
        %1053 = vmatpush1.msra.mxu0 0.0
        %1054 = vmatprep.subr.mxu0 0.0
        %1055 = vmatpush1.msra.mxu0 0.0
        %1056 = vmatprep.subr.mxu0 0.0
        %1057 = vmatpush1.msra.mxu0 0.0
        %1058 = vmatprep.subr.mxu0 0.0
        %1059 = vmatpush1.msra.mxu0 0.0
        %1060 = vmatprep.subr.mxu0 0.0
        %1061 = vmatpush1.msra.mxu0 0.0
        %1062 = vmatprep.subr.mxu0 0.0
        %1063 = vmatpush1.msra.mxu0 0.0
        %1064 = vmatprep.subr.mxu0 0.0
        %1065 = vmatpush1.msra.mxu0 0.0
        %1066 = vmatprep.subr.mxu0 0.0
        %1067 = vmatpush1.msra.mxu0 0.0
        %1068 = vmatprep.subr.mxu0 0.0
        %1069 = vmatpush1.msra.mxu0 0.0
        %1070 = vmatprep.subr.mxu0 0.0
        %1071 = vmatpush1.msra.mxu0 0.0
        %1072 = vmatprep.mubr.f32.mxu0 0.0
        %1073 = vmatmul.mubr.f32.gmra.mrb[0].mxu0 %v1006
        %v1074 = vpop.f32.mrb[0].mxu0
        %v1075 = vadd.f32 0.0, %v1074
        %v1076 = vpop.f32.mrb[0].mxu0
        %v1077 = vadd.f32 0.0, %v1076
        %1078 = vdwg.mxu0
        %v1079 = vmul.f32 %v1001, %v1001
        %v1080 = vmul.f32 %v1002, %v1002
        %1081 = vmatprep.subr.mxu0 %v1080
        %1082 = vmatpush1.msra.mxu0 %v1079
        %1083 = vmatprep.subr.mxu0 0.0
        %1084 = vmatpush1.msra.mxu0 0.0
        %1085 = vmatprep.subr.mxu0 0.0
        %1086 = vmatpush1.msra.mxu0 0.0
        %1087 = vmatprep.subr.mxu0 0.0
        %1088 = vmatpush1.msra.mxu0 0.0
        %1089 = vmatprep.subr.mxu0 0.0
        %1090 = vmatpush1.msra.mxu0 0.0
        %1091 = vmatprep.subr.mxu0 0.0
        %1092 = vmatpush1.msra.mxu0 0.0
        %1093 = vmatprep.subr.mxu0 0.0
        %1094 = vmatpush1.msra.mxu0 0.0
        %1095 = vmatprep.subr.mxu0 0.0
        %1096 = vmatpush1.msra.mxu0 0.0
        %1097 = vmatprep.subr.mxu0 0.0
        %1098 = vmatpush1.msra.mxu0 0.0
        %1099 = vmatprep.subr.mxu0 0.0
        %1100 = vmatpush1.msra.mxu0 0.0
        %1101 = vmatprep.subr.mxu0 0.0
        %1102 = vmatpush1.msra.mxu0 0.0
        %1103 = vmatprep.subr.mxu0 0.0
        %1104 = vmatpush1.msra.mxu0 0.0
        %1105 = vmatprep.subr.mxu0 0.0
        %1106 = vmatpush1.msra.mxu0 0.0
        %1107 = vmatprep.subr.mxu0 0.0
        %1108 = vmatpush1.msra.mxu0 0.0
        %1109 = vmatprep.subr.mxu0 0.0
        %1110 = vmatpush1.msra.mxu0 0.0
        %1111 = vmatprep.subr.mxu0 0.0
        %1112 = vmatpush1.msra.mxu0 0.0
        %1113 = vmatprep.subr.mxu0 0.0
        %1114 = vmatpush1.msra.mxu0 0.0
        %1115 = vmatprep.subr.mxu0 0.0
        %1116 = vmatpush1.msra.mxu0 0.0
        %1117 = vmatprep.subr.mxu0 0.0
        %1118 = vmatpush1.msra.mxu0 0.0
        %1119 = vmatprep.subr.mxu0 0.0
        %1120 = vmatpush1.msra.mxu0 0.0
        %1121 = vmatprep.subr.mxu0 0.0
        %1122 = vmatpush1.msra.mxu0 0.0
        %1123 = vmatprep.subr.mxu0 0.0
        %1124 = vmatpush1.msra.mxu0 0.0
        %1125 = vmatprep.subr.mxu0 0.0
        %1126 = vmatpush1.msra.mxu0 0.0
        %1127 = vmatprep.subr.mxu0 0.0
        %1128 = vmatpush1.msra.mxu0 0.0
        %1129 = vmatprep.subr.mxu0 0.0
        %1130 = vmatpush1.msra.mxu0 0.0
        %1131 = vmatprep.subr.mxu0 0.0
        %1132 = vmatpush1.msra.mxu0 0.0
        %1133 = vmatprep.subr.mxu0 0.0
        %1134 = vmatpush1.msra.mxu0 0.0
        %1135 = vmatprep.subr.mxu0 0.0
        %1136 = vmatpush1.msra.mxu0 0.0
        %1137 = vmatprep.subr.mxu0 0.0
        %1138 = vmatpush1.msra.mxu0 0.0
        %1139 = vmatprep.subr.mxu0 0.0
        %1140 = vmatpush1.msra.mxu0 0.0
        %1141 = vmatprep.subr.mxu0 0.0
        %1142 = vmatpush1.msra.mxu0 0.0
        %1143 = vmatprep.subr.mxu0 0.0
        %1144 = vmatpush1.msra.mxu0 0.0
        %1145 = vmatprep.mubr.f32.mxu0 0.0
        %1146 = vmatmul.mubr.f32.gmra.mrb[0].mxu0 %v1006
        %v1147 = vpop.f32.mrb[0].mxu0
        %v1148 = vadd.f32 0.0, %v1147
        %v1149 = vpop.f32.mrb[0].mxu0
        %v1150 = vadd.f32 0.0, %v1149
        %1151 = vdwg.mxu0
        %v1152 = vadd.f32 %v1075, %v1077
        %1153 = vadd.xlane.f32.xlu0 %v1152
        %v1154 = vpop.xlane.xlu0 %1153
        %v1155 = vmul.f32 %v1154, 0.001953125
        %v1156 = vadd.f32 %v1148, %v1150
        %1157 = vadd.xlane.f32.xlu0 %v1156
        %v1158 = vpop.xlane.xlu0 %1157
        %v1159 = vmul.f32 %v1158, 0.001953125
        %v1160 = vmul.f32 %v1155, %v1155
        %v1161 = vsub.f32 %v1159, %v1160
        %v1162 = vsub.f32 %v1001, %v1155
        %v1163 = vsub.f32 %v1002, %v1155
        %v1164 = vadd.f32 %v1161, 1e-05
        %v1165 = vrsqrt.pop %v1164
        %v1166 = vmul.f32 %v1162, %v1165
        %v1167 = vmul.f32 %v1163, %v1165
        %v1168 = vld [vmem:[%s5] sm:$0xff]
        %1170 = vset.pattern.permute.xlu0 0
        %1171 = vperm.xlu0 %1170, %v1168
        %v1172 = vpop.permute.xlu0 %1171
        %v1174 = vmul.f32 %v1166, %v1172
        %v1175 = vmul.f32 %v1167, %v1172
        %v1176 = vld [vmem:[%s6] sm:$0xff]
        %1178 = vset.pattern.permute.xlu0 0
        %1179 = vperm.xlu0 %1178, %v1176
        %v1180 = vpop.permute.xlu0 %1179
        %v1182 = vadd.f32 %v1174, %v1180
        %v1183 = vadd.f32 %v1175, %v1180
        %v1184 = vtanh.pop %v1182
        %v1185 = vtanh.pop %v1183
        %v1186 = vsub.f32 1.0, %v802
        %v1187 = vsub.f32 1.0, %v804
        %v1188 = vmul.f32 %v1186, %v468
        %v1189 = vmul.f32 %v1187, %v469
        %v1190 = vmul.f32 %v802, %v1184
        %v1191 = vmul.f32 %v804, %v1185
        %v1192 = vadd.f32 %v1188, %v1190
        %v1193 = vadd.f32 %v1189, %v1191
        %1194 = vst [vmem:[#allocation2 + $0x10] sm:$0xff] %v1192
        %1195 = vst [vmem:[#allocation2 + $0x18] sm:$0xff] %v1193
        %1196 = vst [vmem:[%s449] sm:$0xff] %v1192
        %1197 = vst [vmem:[%s449 + $0x8] sm:$0xff] %v1193
        %s1198 = sand.u32 %s289, 1
        %s1199 = scalar_lea.sflag [#allocation5], %s1198
        %s1200 = sand.u32 %s289, 1
        %s1201 = smul.addr %s1200, 16
        %s1202 = scalar_lea.vmem [#allocation9], %s1201
        // Predicated region
        $region81: #{tpu_custom_call.1} parent=63 // pred_check
          %p1203 = pneg %p299
        $region82: #{tpu_custom_call.1} parent=63 // pred_check_branch
          %1205 = sbr.rel (%p1203) target = $region84
        $region83: #{tpu_custom_call.1} parent=63 // pred_region
          %s1207 = ssub.s32 256, 256
          %1208 = vsyncadd %s1199, %s1207
          %s1209 = smul.addr %s34, 2
          %s1210 = smul.addr %s33, 8
          %s1211 = sadd.s32 %s1209, %s1210
          %s1212 = smul.addr %s1211, 128
          %s1213 = scalar_lea.hbm %s11, %s1212
          %s1215 = sshll.u32 %s1202, 4
          %s1216 = int_to_ptr.vmem [resolvable:$true] %s1215
          %1218 = dma.vmem_to_hbm [thread:$0]  %s1216, 256, %s1213, %s1199
        $region84: #{tpu_custom_call.1} parent=63 // pred_fallthru
          _
      $region64: #{tpu_custom_call.1} parent=5 // pred_fallthru
        _
      %p1219 = scmp.le.s32.totalorder 2, %s24
      // Predicated region
      $region85: #{tpu_custom_call.1} parent=5 // pred_check
        %p1220 = pneg %p1219
      $region86: #{tpu_custom_call.1} parent=5 // pred_check_branch
        %1222 = sbr.rel (%p1220) target = $region88
      $region87: #{tpu_custom_call.1} parent=5 // pred_region
        %s1223 = ssub.s32 %s24, 2
        // Predicated region
        $region89: #{tpu_custom_call.1} parent=87 // pred_check
          %p1224 = pneg %p305
        $region90: #{tpu_custom_call.1} parent=87 // pred_check_branch
          %1226 = sbr.rel (%p1224) target = $region92
        $region91: #{tpu_custom_call.1} parent=87 // pred_region
          %s1227 = sand.u32 %s290, 1
          %s1228 = scalar_lea.sflag [#allocation5], %s1227
          %s1229 = sand.u32 %s290, 1
          %s1230 = smul.addr %s1229, 16
          %s1231 = scalar_lea.vmem [#allocation9], %s1230
          %1232 = dma.done %s1228, 256
        $region92: #{tpu_custom_call.1} parent=87 // pred_fallthru
          _
      $region88: #{tpu_custom_call.1} parent=5 // pred_fallthru
        _
    $region6: #{tpu_custom_call.1} parent=1 // loop_footer
      %s28 = sadd.s32 1, %s24
    $region7: #{tpu_custom_call.1} parent=1 // loop_footer_branch
      %23 = sbr.rel target = $region3
    $region8: #{tpu_custom_call.1} parent=1 // loop_exit
      _
    %1233 = vsyncpa [#allocation4], 1
    %s1234 = scalar_lea.sflag [#allocation4], 1
    %1235 = vsyncpa %s1234, 1
    %1236 = vsyncpa [#allocation7], 1
    %1237 = vsyncpa [#allocation5], 1
    %s1238 = scalar_lea.sflag [#allocation5], 1
    %1239 = vsyncpa %s1238, 1

</llo_original>
